<compile_context>
chip_gen: v6e
topology: v6e:2x2x1
jax: 0.10.0
libtpu: 0.0.40
codegen_flags: <defaults>
</compile_context>

<pallas_src>
import functools

import jax
import jax.numpy as jnp
import numpy as np
from jax.experimental import pallas as pl
from jax.experimental.pallas import tpu as pltpu

# NOTE: the additive mask bias must stay in f32 (with the f32 sim); in bf16 it
# would overflow to -inf and the max-subtraction would produce NaNs.
_MASK_BIAS = -1e30


def _layernorm(x, w, b, eps=1e-5):
    mu = jnp.mean(x, axis=-1, keepdims=True)
    xc = x - mu
    var = jnp.mean(xc * xc, axis=-1, keepdims=True)
    return xc * jax.lax.rsqrt(var + eps) * w + b


def gated_xattn_kernel(
    x_ref, media_ref, tt_ref, mt_ref,
    ln1w_ref, ln1b_ref, wq_ref, wkv_ref, wout_ref,
    ln2w_ref, ln2b_ref, wff1_ref, wff2_ref, gates_ref,
    o_ref, x1_scr, xn2_scr, *, heads, dim_head,
):
    f = pl.program_id(2)
    nf = pl.num_programs(2)
    inner = heads * dim_head

    # ---- masked cross-attention + gated residual: once per (b, t) tile ----
    @pl.when(f == 0)
    def _attention():
        xb = x_ref[0].astype(jnp.float32)            # (bt, D)
        mb = media_ref[0]                            # (S, Dv) bf16
        text_time = tt_ref[0]                        # (bt, 1) int32
        media_time = mt_ref[0]                       # (1, S)  int32
        bt = xb.shape[0]

        # Mask terms hoisted out of the attention math (shared by all heads).
        bias = jnp.where(text_time == media_time, 0.0, _MASK_BIAS)  # (bt, S) f32
        keep = (text_time != 0).astype(jnp.float32)                 # (bt, 1) f32

        xn = _layernorm(xb, ln1w_ref[...], ln1b_ref[...]).astype(jnp.bfloat16)
        # attention scale is folded into Wq on the host.
        q = jnp.dot(xn, wq_ref[...], preferred_element_type=jnp.float32)    # (bt, inner)
        kv = jnp.dot(mb, wkv_ref[...], preferred_element_type=jnp.float32)  # (S, 2*inner)
        k = kv[:, :inner]
        v = kv[:, inner:]

        # (rows, H*dh) -> (H, rows, dh): one reshape + one transpose (no per-head
        # slicing / stack).  pltpu.einshape would also work here.
        def heads_first(t):
            r = t.shape[0]
            return jnp.transpose(t.reshape(r, heads, dim_head), (1, 0, 2))

        qh = heads_first(q).astype(jnp.bfloat16)     # (H, bt, dh)
        kh = heads_first(k).astype(jnp.bfloat16)     # (H, S,  dh)
        vh = heads_first(v).astype(jnp.bfloat16)     # (H, S,  dh)

        sim = jax.lax.dot_general(                   # (H, bt, S) f32
            qh, kh, (((2,), (2,)), ((0,), (0,))),
            preferred_element_type=jnp.float32)
        sim = sim + bias[None]
        sim = sim - jnp.max(sim, axis=-1, keepdims=True)
        p = jnp.exp(sim)
        p = p * pl.reciprocal(jnp.sum(p, axis=-1, keepdims=True), approx=True)
        # Zero rows with no preceding media AFTER normalization (as in the ref).
        p = p * keep[None]

        out = jax.lax.dot_general(                   # (H, bt, dh) f32
            p.astype(jnp.bfloat16), vh, (((2,), (1,)), ((0,), (0,))),
            preferred_element_type=jnp.float32)
        # Merge heads and apply the output projection as ONE (bt, inner)x(inner, D)
        # MXU contraction: the head reduction happens in the MXU accumulator, no
        # (H, bt, D) f32 intermediate and no VPU head-sum.
        merged = jnp.transpose(out, (1, 0, 2)).reshape(bt, inner).astype(jnp.bfloat16)
        attn_out = jnp.dot(merged, wout_ref[...], preferred_element_type=jnp.float32)

        x1 = attn_out * gates_ref[0] + xb            # tanh(attn_gate) precomputed
        x1_scr[...] = x1
        xn2_scr[...] = _layernorm(x1, ln2w_ref[...], ln2b_ref[...]).astype(jnp.bfloat16)
        # FFN accumulates into the resident output block; init it here.
        o_ref[...] = jnp.zeros(o_ref.shape, o_ref.dtype)

    # ---- gated FFN: reduction over ff_inner tiles, accumulated into o_ref ----
    h1 = jnp.dot(xn2_scr[...], wff1_ref[...], preferred_element_type=jnp.float32)
    # tanh-approx GELU (EUP); deviates from exact nn.GELU by <~3e-3 abs.
    h1 = jax.nn.gelu(h1, approximate=True)
    o_ref[0] += jnp.dot(h1.astype(jnp.bfloat16), wff2_ref[...],
                        preferred_element_type=jnp.float32).astype(o_ref.dtype)

    @pl.when(f == nf - 1)
    def _finalize():
        o_ref[0] = (o_ref[0].astype(jnp.float32) * gates_ref[1]
                    + x1_scr[...]).astype(o_ref.dtype)


def _round_up(v, m):
    return (v + m - 1) // m * m


def gated_cross_attention_block(
    x, media, media_locations, params, *, heads, dim_head,
    block_t=512, block_f=256, vmem_limit_bytes=56 * 1024 * 1024,
):
    B, T, D = x.shape
    _, T_img, n, Dv = media.shape
    S = T_img * n
    inner = heads * dim_head
    Fi = params["wff1"].shape[1]
    out_dtype = x.dtype
    cdt = jnp.bfloat16            # matmul operand dtype (f32 MXU accumulation)
    f32 = jnp.float32

    # Sublane/lane-aligned tiles; ragged extents zero-padded (never promoted to a
    # full-extent tile, which would blow the VMEM budget on real shapes).
    block_t = _round_up(min(block_t, T), 8)
    block_f = _round_up(min(block_f, Fi), 128)
    T_pad = _round_up(T, block_t)
    F_pad = _round_up(Fi, block_f)

    x_p = x.astype(cdt)
    if T_pad != T:
        x_p = jnp.pad(x_p, ((0, 0), (0, T_pad - T), (0, 0)))

    media_flat = media.reshape(B, S, Dv).astype(cdt)

    text_time = jnp.cumsum(media_locations.astype(jnp.int32), axis=-1)[:, -T:]
    if T_pad != T:
        text_time = jnp.pad(text_time, ((0, 0), (0, T_pad - T)))  # padded rows: keep==0
    text_time = text_time.reshape(B, T_pad, 1)
    media_time = jnp.repeat(
        jnp.arange(1, T_img + 1, dtype=jnp.int32), n).reshape(1, 1, S)

    ln1w = params["ln1_w"].reshape(1, D).astype(f32)
    ln1b = params["ln1_b"].reshape(1, D).astype(f32)
    ln2w = params["ln2_w"].reshape(1, D).astype(f32)
    ln2b = params["ln2_b"].reshape(1, D).astype(f32)
    wq = (params["wq"] * (dim_head ** -0.5)).astype(cdt)     # attn scale folded in
    wkv = params["wkv"].astype(cdt)
    wout = params["wout"].astype(cdt)                        # (inner, D)
    wff1 = params["wff1"].astype(cdt)
    wff2 = params["wff2"].astype(cdt)
    if F_pad != Fi:                                          # zero pad -> contributes 0
        wff1 = jnp.pad(wff1, ((0, 0), (0, F_pad - Fi)))
        wff2 = jnp.pad(wff2, ((0, F_pad - Fi), (0, 0)))
    gates = jnp.tanh(jnp.stack([
        jnp.reshape(params["attn_gate"], ()),
        jnp.reshape(params["ff_gate"], ())]).astype(f32))    # (2,), lives in SMEM

    kernel = functools.partial(gated_xattn_kernel, heads=heads, dim_head=dim_head)

    def const(shape):
        nd = len(shape)
        return pl.BlockSpec(shape, lambda b, t, f, _nd=nd: (0,) * _nd)

    grid = (B, T_pad // block_t, F_pad // block_f)
    out = pl.pallas_call(
        kernel,
        out_shape=jax.ShapeDtypeStruct((B, T_pad, D), jnp.float32),
        grid_spec=pltpu.PrefetchScalarGridSpec(
            num_scalar_prefetch=0,
            grid=grid,
            in_specs=[
                pl.BlockSpec((1, block_t, D), lambda b, t, f: (b, t, 0)),   # x (bf16)
                pl.BlockSpec((1, S, Dv), lambda b, t, f: (b, 0, 0)),        # media (flat)
                pl.BlockSpec((1, block_t, 1), lambda b, t, f: (b, t, 0)),   # text_time
                pl.BlockSpec((1, 1, S), lambda b, t, f: (0, 0, 0)),         # media_time
                const((1, D)), const((1, D)),                               # ln1 w/b
                const((D, inner)),                                          # Wq (pre-scaled)
                const((Dv, 2 * inner)),                                     # Wkv
                const((inner, D)),                                          # Wout
                const((1, D)), const((1, D)),                               # ln2 w/b
                pl.BlockSpec((D, block_f), lambda b, t, f: (0, f)),         # Wff1 tile
                pl.BlockSpec((block_f, D), lambda b, t, f: (f, 0)),         # Wff2 tile
                pl.BlockSpec(memory_space=pltpu.MemorySpace.SMEM),          # tanh(gates)
            ],
            out_specs=pl.BlockSpec((1, block_t, D), lambda b, t, f: (b, t, 0)),
            scratch_shapes=[
                pltpu.VMEM((block_t, D), jnp.float32),    # x1 (post-attn residual)
                pltpu.VMEM((block_t, D), jnp.bfloat16),   # LN2(x1), matmul-ready
            ],
        ),
        compiler_params=pltpu.CompilerParams(
            dimension_semantics=("parallel", "parallel", "arbitrary"),
            vmem_limit_bytes=vmem_limit_bytes,
        ),
    )(x_p, media_flat, text_time, media_time,
      ln1w, ln1b, wq, wkv, wout,
      ln2w, ln2b, wff1, wff2, gates)

    if T_pad != T:
        out = out[:, :T]
    return out.astype(out_dtype)


def reference_forward(x, media, media_locations, p, *, heads, dim_head):
    """Pure-JAX (f32) mirror of the PyTorch forward, used for validation."""
    B, T, D = x.shape
    _, T_img, n, Dv = media.shape
    inner = heads * dim_head
    scale = dim_head ** -0.5

    def ln(t, w, b):
        mu = t.mean(-1, keepdims=True)
        var = ((t - mu) ** 2).mean(-1, keepdims=True)
        return (t - mu) / jnp.sqrt(var + 1e-5) * w + b

    xn = ln(x, p["ln1_w"], p["ln1_b"])
    q = xn @ p["wq"]
    mf = media.reshape(B, T_img * n, Dv)
    kv = mf @ p["wkv"]
    k, v = kv[..., :inner], kv[..., inner:]

    def split_heads(t):
        return t.reshape(t.shape[0], t.shape[1], heads, dim_head).transpose(0, 2, 1, 3)

    q, k, v = map(split_heads, (q, k, v))
    q = q * scale
    sim = jnp.einsum("bhid,bhjd->bhij", q, k)

    media_time = jnp.arange(T_img) + 1
    text_time = jnp.cumsum(media_locations.astype(jnp.int32), -1)[:, -T:]
    mask = text_time[:, None, :, None] == jnp.repeat(media_time, n)[None, None, None, :]
    sim = jnp.where(mask, sim, -jnp.finfo(sim.dtype).max)
    sim = sim - sim.max(-1, keepdims=True)
    attn = jax.nn.softmax(sim, -1)
    attn = jnp.where((text_time == 0)[:, None, :, None], 0.0, attn)
    out = jnp.einsum("bhij,bhjd->bhid", attn, v)
    out = out.transpose(0, 2, 1, 3).reshape(B, T, inner)
    attn_out = out @ p["wout"]
    x1 = attn_out * jnp.tanh(p["attn_gate"]) + x

    xn2 = ln(x1, p["ln2_w"], p["ln2_b"])
    ff = jax.nn.gelu(xn2 @ p["wff1"], approximate=False) @ p["wff2"]
    return ff * jnp.tanh(p["ff_gate"]) + x1


if __name__ == "__main__":
    # Small, module-consistent shapes.
    B, T_txt, T_txt_all, D = 2, 8, 12, 32          # text: (B, T_txt, D)
    T_img, n_latents, Dv = 2, 4, 16                # media: (B, T_img, n, Dv)
    heads, dim_head, ff_mult = 2, 8, 4
    inner = heads * dim_head
    ff_inner = D * ff_mult

    key = jax.random.PRNGKey(0)
    ks = jax.random.split(key, 8)

    x = jax.random.normal(ks[0], (B, T_txt, D), dtype=jnp.float32)
    media = jax.random.normal(ks[1], (B, T_img, n_latents, Dv), dtype=jnp.float32)
    media_locations = jax.random.bernoulli(ks[2], 0.3, (B, T_txt_all))

    # Deterministic synthetic parameters.  NOTE: the PyTorch module inits the
    # gates to 0.0 (identity block); nonzero gates here exercise both gated paths.
    params = dict(
        ln1_w=jnp.ones((D,), jnp.float32), ln1_b=jnp.zeros((D,), jnp.float32),
        wq=jax.random.normal(ks[3], (D, inner), jnp.float32) * 0.05,
        wkv=jax.random.normal(ks[4], (Dv, 2 * inner), jnp.float32) * 0.05,
        wout=jax.random.normal(ks[5], (inner, D), jnp.float32) * 0.05,
        ln2_w=jnp.ones((D,), jnp.float32), ln2_b=jnp.zeros((D,), jnp.float32),
        wff1=jax.random.normal(ks[6], (D, ff_inner), jnp.float32) * 0.05,
        wff2=jax.random.normal(ks[7], (ff_inner, D), jnp.float32) * 0.05,
        attn_gate=jnp.float32(0.5), ff_gate=jnp.float32(0.25),
    )

    out = gated_cross_attention_block(
        x, media, media_locations, params, heads=heads, dim_head=dim_head)
    out = jax.block_until_ready(out)

    ref = reference_forward(
        x, media, media_locations, params, heads=heads, dim_head=dim_head)
    # Kernel runs bf16 matmul operands (f32 accumulation), approx softmax
    # reciprocal and tanh-approx GELU -> compare with bf16-level tolerance.
    np.testing.assert_allclose(np.asarray(out), np.asarray(ref), rtol=1e-2, atol=1e-2)

    print("KERNEL_OK")
</pallas_src>

<mosaic_0001>
module attributes {stable_mosaic.version = 11 : i64} {
  func.func @gated_xattn_kernel(%arg0: i32, %arg1: i32, %arg2: i32, %arg3: memref<1x8x32xbf16, #tpu.memory_space<vmem>>, %arg4: memref<1x8x16xbf16, #tpu.memory_space<vmem>>, %arg5: memref<1x8x1xi32, #tpu.memory_space<vmem>>, %arg6: memref<1x1x8xi32, #tpu.memory_space<vmem>>, %arg7: memref<1x32xf32, #tpu.memory_space<vmem>>, %arg8: memref<1x32xf32, #tpu.memory_space<vmem>>, %arg9: memref<32x16xbf16, #tpu.memory_space<vmem>>, %arg10: memref<16x32xbf16, #tpu.memory_space<vmem>>, %arg11: memref<16x32xbf16, #tpu.memory_space<vmem>>, %arg12: memref<1x32xf32, #tpu.memory_space<vmem>>, %arg13: memref<1x32xf32, #tpu.memory_space<vmem>>, %arg14: memref<32x128xbf16, #tpu.memory_space<vmem>>, %arg15: memref<128x32xbf16, #tpu.memory_space<vmem>>, %arg16: memref<2xf32, #tpu.memory_space<smem>>, %arg17: memref<1x8x32xf32, #tpu.memory_space<vmem>>, %arg18: memref<8x32xf32, #tpu.memory_space<vmem>>, %arg19: memref<8x32xbf16, #tpu.memory_space<vmem>>) attributes {dimension_semantics = [#tpu.dimension_semantics<parallel>, #tpu.dimension_semantics<parallel>, #tpu.dimension_semantics<arbitrary>], iteration_bounds = array<i64: 2, 1, 1>, scalar_prefetch = 0 : i64, scratch_operands = 2 : i64, tpu.core_type = #tpu.core_type<tc>, window_params = [{transform_indices = @transform_0, window_bounds = array<i64: 1, 8, 32>}, {transform_indices = @transform_1, window_bounds = array<i64: 1, 8, 16>}, {transform_indices = @transform_2, window_bounds = array<i64: 1, 8, 1>}, {pipeline_mode = #tpu.pipeline_mode<synchronous>, transform_indices = @transform_3, window_bounds = array<i64: 1, 1, 8>}, {pipeline_mode = #tpu.pipeline_mode<synchronous>, transform_indices = @transform_4, window_bounds = array<i64: 1, 32>}, {pipeline_mode = #tpu.pipeline_mode<synchronous>, transform_indices = @transform_5, window_bounds = array<i64: 1, 32>}, {pipeline_mode = #tpu.pipeline_mode<synchronous>, transform_indices = @transform_6, window_bounds = array<i64: 32, 16>}, {pipeline_mode = #tpu.pipeline_mode<synchronous>, transform_indices = @transform_7, window_bounds = array<i64: 16, 32>}, {pipeline_mode = #tpu.pipeline_mode<synchronous>, transform_indices = @transform_8, window_bounds = array<i64: 16, 32>}, {pipeline_mode = #tpu.pipeline_mode<synchronous>, transform_indices = @transform_9, window_bounds = array<i64: 1, 32>}, {pipeline_mode = #tpu.pipeline_mode<synchronous>, transform_indices = @transform_10, window_bounds = array<i64: 1, 32>}, {transform_indices = @transform_11, window_bounds = array<i64: 32, 128>}, {transform_indices = @transform_12, window_bounds = array<i64: 128, 32>}, {transform_indices = @transform_13, window_bounds = array<i64: 2>}, {transform_indices = @transform_14, window_bounds = array<i64: 1, 8, 32>}]} {
    %c0_i32 = arith.constant 0 : i32
    %0 = arith.cmpi eq, %arg2, %c0_i32 : i32
    %1 = arith.extui %0 : i1 to i32
    %c0_i32_0 = arith.constant 0 : i32
    %2 = arith.cmpi ne, %1, %c0_i32_0 : i32
    scf.if %2 {
      %c0_19 = arith.constant 0 : index
      %c0_20 = arith.constant 0 : index
      %c0_21 = arith.constant 0 : index
      %31 = vector.load %arg3[%c0_19, %c0_20, %c0_21] : memref<1x8x32xbf16, #tpu.memory_space<vmem>>, vector<1x8x32xbf16>
      %32 = vector.shape_cast %31 : vector<1x8x32xbf16> to vector<8x32xbf16>
      %33 = arith.extf %32 : vector<8x32xbf16> to vector<8x32xf32>
      %c0_22 = arith.constant 0 : index
      %c0_23 = arith.constant 0 : index
      %c0_24 = arith.constant 0 : index
      %34 = vector.load %arg4[%c0_22, %c0_23, %c0_24] : memref<1x8x16xbf16, #tpu.memory_space<vmem>>, vector<1x8x16xbf16>
      %35 = vector.shape_cast %34 : vector<1x8x16xbf16> to vector<8x16xbf16>
      %c0_25 = arith.constant 0 : index
      %c0_26 = arith.constant 0 : index
      %c0_27 = arith.constant 0 : index
      %36 = vector.load %arg5[%c0_25, %c0_26, %c0_27] : memref<1x8x1xi32, #tpu.memory_space<vmem>>, vector<1x8x1xi32>
      %37 = vector.shape_cast %36 : vector<1x8x1xi32> to vector<8x1xi32>
      %c0_28 = arith.constant 0 : index
      %c0_29 = arith.constant 0 : index
      %c0_30 = arith.constant 0 : index
      %38 = vector.load %arg6[%c0_28, %c0_29, %c0_30] : memref<1x1x8xi32, #tpu.memory_space<vmem>>, vector<1x1x8xi32>
      %39 = vector.shape_cast %38 : vector<1x1x8xi32> to vector<1x8xi32>
      %40 = vector.broadcast %37 : vector<8x1xi32> to vector<8x8xi32>
      %41 = vector.broadcast %39 : vector<1x8xi32> to vector<8x8xi32>
      %42 = arith.cmpi eq, %40, %41 : vector<8x8xi32>
      %cst_31 = arith.constant 0.000000e+00 : f32
      %cst_32 = arith.constant -1.000000e+30 : f32
      %43 = vector.broadcast %cst_31 : f32 to vector<8x8xf32>
      %44 = vector.broadcast %cst_32 : f32 to vector<8x8xf32>
      %45 = arith.select %42, %43, %44 : vector<8x8xi1>, vector<8x8xf32>
      %c0_i32_33 = arith.constant 0 : i32
      %46 = vector.broadcast %c0_i32_33 : i32 to vector<8x1xi32>
      %47 = arith.cmpi ne, %37, %46 : vector<8x1xi32>
      %48 = arith.extui %47 : vector<8x1xi1> to vector<8x1xi32>
      %49 = arith.sitofp %48 : vector<8x1xi32> to vector<8x1xf32>
      %c0_34 = arith.constant 0 : index
      %c0_35 = arith.constant 0 : index
      %50 = vector.load %arg7[%c0_34, %c0_35] : memref<1x32xf32, #tpu.memory_space<vmem>>, vector<1x32xf32>
      %c0_36 = arith.constant 0 : index
      %c0_37 = arith.constant 0 : index
      %51 = vector.load %arg8[%c0_36, %c0_37] : memref<1x32xf32, #tpu.memory_space<vmem>>, vector<1x32xf32>
      %cst_38 = arith.constant dense<0.000000e+00> : vector<8xf32>
      %52 = vector.multi_reduction <add>, %33, %cst_38 [1] : vector<8x32xf32> to vector<8xf32>
      %53 = vector.shape_cast %52 : vector<8xf32> to vector<8x1xf32>
      %cst_39 = arith.constant 3.200000e+01 : f32
      %54 = vector.broadcast %cst_39 : f32 to vector<8x1xf32>
      %55 = arith.divf %53, %54 : vector<8x1xf32>
      %56 = vector.broadcast %55 : vector<8x1xf32> to vector<8x32xf32>
      %57 = arith.subf %33, %56 : vector<8x32xf32>
      %58 = arith.mulf %57, %57 : vector<8x32xf32>
      %cst_40 = arith.constant dense<0.000000e+00> : vector<8xf32>
      %59 = vector.multi_reduction <add>, %58, %cst_40 [1] : vector<8x32xf32> to vector<8xf32>
      %60 = vector.shape_cast %59 : vector<8xf32> to vector<8x1xf32>
      %cst_41 = arith.constant 3.200000e+01 : f32
      %61 = vector.broadcast %cst_41 : f32 to vector<8x1xf32>
      %62 = arith.divf %60, %61 : vector<8x1xf32>
      %cst_42 = arith.constant 9.99999974E-6 : f32
      %63 = vector.broadcast %cst_42 : f32 to vector<8x1xf32>
      %64 = arith.addf %62, %63 : vector<8x1xf32>
      %65 = math.rsqrt %64 : vector<8x1xf32>
      %66 = vector.broadcast %65 : vector<8x1xf32> to vector<8x32xf32>
      %67 = arith.mulf %57, %66 : vector<8x32xf32>
      %68 = vector.broadcast %50 : vector<1x32xf32> to vector<8x32xf32>
      %69 = arith.mulf %67, %68 : vector<8x32xf32>
      %70 = vector.broadcast %51 : vector<1x32xf32> to vector<8x32xf32>
      %71 = arith.addf %69, %70 : vector<8x32xf32>
      %72 = arith.truncf %71 : vector<8x32xf32> to vector<8x32xbf16>
      %c0_43 = arith.constant 0 : index
      %c0_44 = arith.constant 0 : index
      %73 = vector.load %arg9[%c0_43, %c0_44] : memref<32x16xbf16, #tpu.memory_space<vmem>>, vector<32x16xbf16>
      %cst_45 = arith.constant dense<0.000000e+00> : vector<8x16xf32>
      %74 = tpu.matmul %72, %73, %cst_45 {dimension_numbers = #tpu.dot_dimension_numbers<[1], [0], [0], [1], [0, 0, 1, 1], [], []>} : vector<8x32xbf16>, vector<32x16xbf16>, vector<8x16xf32> -> vector<8x16xf32>
      %c0_46 = arith.constant 0 : index
      %c0_47 = arith.constant 0 : index
      %75 = vector.load %arg10[%c0_46, %c0_47] : memref<16x32xbf16, #tpu.memory_space<vmem>>, vector<16x32xbf16>
      %cst_48 = arith.constant dense<0.000000e+00> : vector<8x32xf32>
      %76 = tpu.matmul %35, %75, %cst_48 {dimension_numbers = #tpu.dot_dimension_numbers<[1], [0], [0], [1], [0, 0, 1, 1], [], []>} : vector<8x16xbf16>, vector<16x32xbf16>, vector<8x32xf32> -> vector<8x32xf32>
      %77 = vector.extract_strided_slice %76 {offsets = [0, 0], sizes = [8, 16], strides = [1, 1]} : vector<8x32xf32> to vector<8x16xf32>
      %78 = vector.extract_strided_slice %76 {offsets = [0, 16], sizes = [8, 16], strides = [1, 1]} : vector<8x32xf32> to vector<8x16xf32>
      %79 = vector.shape_cast %74 : vector<8x16xf32> to vector<8x2x8xf32>
      %80 = tpu.transpose %79, [1, 0, 2] : vector<8x2x8xf32> -> vector<2x8x8xf32>
      %81 = arith.truncf %80 : vector<2x8x8xf32> to vector<2x8x8xbf16>
      %82 = vector.shape_cast %77 : vector<8x16xf32> to vector<8x2x8xf32>
      %83 = tpu.transpose %82, [1, 0, 2] : vector<8x2x8xf32> -> vector<2x8x8xf32>
      %84 = arith.truncf %83 : vector<2x8x8xf32> to vector<2x8x8xbf16>
      %85 = vector.shape_cast %78 : vector<8x16xf32> to vector<8x2x8xf32>
      %86 = tpu.transpose %85, [1, 0, 2] : vector<8x2x8xf32> -> vector<2x8x8xf32>
      %87 = arith.truncf %86 : vector<2x8x8xf32> to vector<2x8x8xbf16>
      %cst_49 = arith.constant dense<0.000000e+00> : vector<2x8x8xf32>
      %88 = tpu.matmul %81, %84, %cst_49 {dimension_numbers = #tpu.dot_dimension_numbers<[2], [2], [1], [1], [0, 0, 0, 1, 1, 1], [0], [0]>} : vector<2x8x8xbf16>, vector<2x8x8xbf16>, vector<2x8x8xf32> -> vector<2x8x8xf32>
      %89 = vector.shape_cast %45 : vector<8x8xf32> to vector<1x8x8xf32>
      %90 = vector.broadcast %89 : vector<1x8x8xf32> to vector<2x8x8xf32>
      %91 = arith.addf %88, %90 : vector<2x8x8xf32>
      %cst_50 = arith.constant dense<0xFF800000> : vector<2x8xf32>
      %92 = vector.multi_reduction <maximumf>, %91, %cst_50 [2] : vector<2x8x8xf32> to vector<2x8xf32>
      %93 = vector.shape_cast %92 : vector<2x8xf32> to vector<2x8x1xf32>
      %94 = vector.broadcast %93 : vector<2x8x1xf32> to vector<2x8x8xf32>
      %95 = arith.subf %91, %94 : vector<2x8x8xf32>
      %96 = math.exp %95 : vector<2x8x8xf32>
      %cst_51 = arith.constant dense<0.000000e+00> : vector<2x8xf32>
      %97 = vector.multi_reduction <add>, %96, %cst_51 [2] : vector<2x8x8xf32> to vector<2x8xf32>
      %98 = vector.shape_cast %97 : vector<2x8xf32> to vector<2x8x1xf32>
      %99 = tpu.reciprocal %98 {approx = true} : vector<2x8x1xf32> -> vector<2x8x1xf32>
      %100 = vector.broadcast %99 : vector<2x8x1xf32> to vector<2x8x8xf32>
      %101 = arith.mulf %96, %100 : vector<2x8x8xf32>
      %102 = vector.shape_cast %49 : vector<8x1xf32> to vector<1x8x1xf32>
      %103 = vector.broadcast %102 : vector<1x8x1xf32> to vector<2x8x8xf32>
      %104 = arith.mulf %101, %103 : vector<2x8x8xf32>
      %105 = arith.truncf %104 : vector<2x8x8xf32> to vector<2x8x8xbf16>
      %cst_52 = arith.constant dense<0.000000e+00> : vector<2x8x8xf32>
      %106 = tpu.matmul %105, %87, %cst_52 {dimension_numbers = #tpu.dot_dimension_numbers<[2], [1], [1], [2], [0, 0, 0, 1, 1, 2], [0], [0]>} : vector<2x8x8xbf16>, vector<2x8x8xbf16>, vector<2x8x8xf32> -> vector<2x8x8xf32>
      %107 = tpu.transpose %106, [1, 0, 2] : vector<2x8x8xf32> -> vector<8x2x8xf32>
      %108 = vector.shape_cast %107 : vector<8x2x8xf32> to vector<8x16xf32>
      %109 = arith.truncf %108 : vector<8x16xf32> to vector<8x16xbf16>
      %c0_53 = arith.constant 0 : index
      %c0_54 = arith.constant 0 : index
      %110 = vector.load %arg11[%c0_53, %c0_54] : memref<16x32xbf16, #tpu.memory_space<vmem>>, vector<16x32xbf16>
      %cst_55 = arith.constant dense<0.000000e+00> : vector<8x32xf32>
      %111 = tpu.matmul %109, %110, %cst_55 {dimension_numbers = #tpu.dot_dimension_numbers<[1], [0], [0], [1], [0, 0, 1, 1], [], []>} : vector<8x16xbf16>, vector<16x32xbf16>, vector<8x32xf32> -> vector<8x32xf32>
      %c0_56 = arith.constant 0 : index
      %112 = memref.load %arg16[%c0_56] : memref<2xf32, #tpu.memory_space<smem>>
      %113 = vector.broadcast %112 : f32 to vector<8x32xf32>
      %114 = arith.mulf %111, %113 : vector<8x32xf32>
      %115 = arith.addf %114, %33 : vector<8x32xf32>
      %c0_57 = arith.constant 0 : index
      %c0_58 = arith.constant 0 : index
      %116 = vector.load %arg18[%c0_57, %c0_58] : memref<8x32xf32, #tpu.memory_space<vmem>>, vector<8x32xf32>
      tpu.vector_store %arg18[%c0_57, %c0_58], %115 {strides = array<i32>} : memref<8x32xf32, #tpu.memory_space<vmem>>, vector<8x32xf32>,
      %c0_59 = arith.constant 0 : index
      %c0_60 = arith.constant 0 : index
      %117 = vector.load %arg12[%c0_59, %c0_60] : memref<1x32xf32, #tpu.memory_space<vmem>>, vector<1x32xf32>
      %c0_61 = arith.constant 0 : index
      %c0_62 = arith.constant 0 : index
      %118 = vector.load %arg13[%c0_61, %c0_62] : memref<1x32xf32, #tpu.memory_space<vmem>>, vector<1x32xf32>
      %cst_63 = arith.constant dense<0.000000e+00> : vector<8xf32>
      %119 = vector.multi_reduction <add>, %115, %cst_63 [1] : vector<8x32xf32> to vector<8xf32>
      %120 = vector.shape_cast %119 : vector<8xf32> to vector<8x1xf32>
      %cst_64 = arith.constant 3.200000e+01 : f32
      %121 = vector.broadcast %cst_64 : f32 to vector<8x1xf32>
      %122 = arith.divf %120, %121 : vector<8x1xf32>
      %123 = vector.broadcast %122 : vector<8x1xf32> to vector<8x32xf32>
      %124 = arith.subf %115, %123 : vector<8x32xf32>
      %125 = arith.mulf %124, %124 : vector<8x32xf32>
      %cst_65 = arith.constant dense<0.000000e+00> : vector<8xf32>
      %126 = vector.multi_reduction <add>, %125, %cst_65 [1] : vector<8x32xf32> to vector<8xf32>
      %127 = vector.shape_cast %126 : vector<8xf32> to vector<8x1xf32>
      %cst_66 = arith.constant 3.200000e+01 : f32
      %128 = vector.broadcast %cst_66 : f32 to vector<8x1xf32>
      %129 = arith.divf %127, %128 : vector<8x1xf32>
      %cst_67 = arith.constant 9.99999974E-6 : f32
      %130 = vector.broadcast %cst_67 : f32 to vector<8x1xf32>
      %131 = arith.addf %129, %130 : vector<8x1xf32>
      %132 = math.rsqrt %131 : vector<8x1xf32>
      %133 = vector.broadcast %132 : vector<8x1xf32> to vector<8x32xf32>
      %134 = arith.mulf %124, %133 : vector<8x32xf32>
      %135 = vector.broadcast %117 : vector<1x32xf32> to vector<8x32xf32>
      %136 = arith.mulf %134, %135 : vector<8x32xf32>
      %137 = vector.broadcast %118 : vector<1x32xf32> to vector<8x32xf32>
      %138 = arith.addf %136, %137 : vector<8x32xf32>
      %139 = arith.truncf %138 : vector<8x32xf32> to vector<8x32xbf16>
      %c0_68 = arith.constant 0 : index
      %c0_69 = arith.constant 0 : index
      %140 = vector.load %arg19[%c0_68, %c0_69] : memref<8x32xbf16, #tpu.memory_space<vmem>>, vector<8x32xbf16>
      tpu.vector_store %arg19[%c0_68, %c0_69], %139 {strides = array<i32>} : memref<8x32xbf16, #tpu.memory_space<vmem>>, vector<8x32xbf16>,
      %cst_70 = arith.constant 0.000000e+00 : f32
      %141 = vector.broadcast %cst_70 : f32 to vector<1x8x32xf32>
      %c0_71 = arith.constant 0 : index
      %c0_72 = arith.constant 0 : index
      %c0_73 = arith.constant 0 : index
      %142 = vector.load %arg17[%c0_71, %c0_72, %c0_73] : memref<1x8x32xf32, #tpu.memory_space<vmem>>, vector<1x8x32xf32>
      tpu.vector_store %arg17[%c0_71, %c0_72, %c0_73], %141 {strides = array<i32>} : memref<1x8x32xf32, #tpu.memory_space<vmem>>, vector<1x8x32xf32>,
    } else {
    }
    %c0 = arith.constant 0 : index
    %c0_1 = arith.constant 0 : index
    %3 = vector.load %arg19[%c0, %c0_1] : memref<8x32xbf16, #tpu.memory_space<vmem>>, vector<8x32xbf16>
    %c0_2 = arith.constant 0 : index
    %c0_3 = arith.constant 0 : index
    %4 = vector.load %arg14[%c0_2, %c0_3] : memref<32x128xbf16, #tpu.memory_space<vmem>>, vector<32x128xbf16>
    %cst = arith.constant dense<0.000000e+00> : vector<8x128xf32>
    %5 = tpu.matmul %3, %4, %cst {dimension_numbers = #tpu.dot_dimension_numbers<[1], [0], [0], [1], [0, 0, 1, 1], [], []>} : vector<8x32xbf16>, vector<32x128xbf16>, vector<8x128xf32> -> vector<8x128xf32>
    %6 = arith.mulf %5, %5 : vector<8x128xf32>
    %7 = arith.mulf %5, %6 : vector<8x128xf32>
    %cst_4 = arith.constant 4.471500e-02 : f32
    %8 = vector.broadcast %cst_4 : f32 to vector<8x128xf32>
    %9 = arith.mulf %8, %7 : vector<8x128xf32>
    %10 = arith.addf %5, %9 : vector<8x128xf32>
    %cst_5 = arith.constant 0.797884583 : f32
    %11 = vector.broadcast %cst_5 : f32 to vector<8x128xf32>
    %12 = arith.mulf %11, %10 : vector<8x128xf32>
    %13 = math.tanh %12 : vector<8x128xf32>
    %cst_6 = arith.constant 1.000000e+00 : f32
    %14 = vector.broadcast %cst_6 : f32 to vector<8x128xf32>
    %15 = arith.addf %14, %13 : vector<8x128xf32>
    %cst_7 = arith.constant 5.000000e-01 : f32
    %16 = vector.broadcast %cst_7 : f32 to vector<8x128xf32>
    %17 = arith.mulf %16, %15 : vector<8x128xf32>
    %18 = arith.mulf %5, %17 : vector<8x128xf32>
    %c0_8 = arith.constant 0 : index
    %c0_9 = arith.constant 0 : index
    %c0_10 = arith.constant 0 : index
    %19 = vector.load %arg17[%c0_8, %c0_9, %c0_10] : memref<1x8x32xf32, #tpu.memory_space<vmem>>, vector<1x8x32xf32>
    %20 = vector.shape_cast %19 : vector<1x8x32xf32> to vector<8x32xf32>
    %21 = arith.truncf %18 : vector<8x128xf32> to vector<8x128xbf16>
    %c0_11 = arith.constant 0 : index
    %c0_12 = arith.constant 0 : index
    %22 = vector.load %arg15[%c0_11, %c0_12] : memref<128x32xbf16, #tpu.memory_space<vmem>>, vector<128x32xbf16>
    %cst_13 = arith.constant dense<0.000000e+00> : vector<8x32xf32>
    %23 = tpu.matmul %21, %22, %cst_13 {dimension_numbers = #tpu.dot_dimension_numbers<[1], [0], [0], [1], [0, 0, 1, 1], [], []>} : vector<8x128xbf16>, vector<128x32xbf16>, vector<8x32xf32> -> vector<8x32xf32>
    %24 = arith.addf %20, %23 : vector<8x32xf32>
    %c0_14 = arith.constant 0 : index
    %c0_15 = arith.constant 0 : index
    %c0_16 = arith.constant 0 : index
    %25 = vector.load %arg17[%c0_14, %c0_15, %c0_16] : memref<1x8x32xf32, #tpu.memory_space<vmem>>, vector<1x8x32xf32>
    %26 = vector.shape_cast %25 : vector<1x8x32xf32> to vector<8x32xf32>
    %27 = vector.shape_cast %24 : vector<8x32xf32> to vector<1x8x32xf32>
    tpu.vector_store %arg17[%c0_14, %c0_15, %c0_16], %27 {strides = array<i32>} : memref<1x8x32xf32, #tpu.memory_space<vmem>>, vector<1x8x32xf32>,
    %c0_i32_17 = arith.constant 0 : i32
    %28 = arith.cmpi eq, %arg2, %c0_i32_17 : i32
    %29 = arith.extui %28 : i1 to i32
    %c0_i32_18 = arith.constant 0 : i32
    %30 = arith.cmpi ne, %29, %c0_i32_18 : i32
    scf.if %30 {
      %c0_19 = arith.constant 0 : index
      %c0_20 = arith.constant 0 : index
      %c0_21 = arith.constant 0 : index
      %31 = vector.load %arg17[%c0_19, %c0_20, %c0_21] : memref<1x8x32xf32, #tpu.memory_space<vmem>>, vector<1x8x32xf32>
      %32 = vector.shape_cast %31 : vector<1x8x32xf32> to vector<8x32xf32>
      %c1 = arith.constant 1 : index
      %33 = memref.load %arg16[%c1] : memref<2xf32, #tpu.memory_space<smem>>
      %34 = vector.broadcast %33 : f32 to vector<8x32xf32>
      %35 = arith.mulf %32, %34 : vector<8x32xf32>
      %c0_22 = arith.constant 0 : index
      %c0_23 = arith.constant 0 : index
      %36 = vector.load %arg18[%c0_22, %c0_23] : memref<8x32xf32, #tpu.memory_space<vmem>>, vector<8x32xf32>
      %37 = arith.addf %35, %36 : vector<8x32xf32>
      %c0_24 = arith.constant 0 : index
      %c0_25 = arith.constant 0 : index
      %c0_26 = arith.constant 0 : index
      %38 = vector.load %arg17[%c0_24, %c0_25, %c0_26] : memref<1x8x32xf32, #tpu.memory_space<vmem>>, vector<1x8x32xf32>
      %39 = vector.shape_cast %38 : vector<1x8x32xf32> to vector<8x32xf32>
      %40 = vector.shape_cast %37 : vector<8x32xf32> to vector<1x8x32xf32>
      tpu.vector_store %arg17[%c0_24, %c0_25, %c0_26], %40 {strides = array<i32>} : memref<1x8x32xf32, #tpu.memory_space<vmem>>, vector<1x8x32xf32>,
    } else {
    }
    return
  }
  func.func @transform_0(%arg0: i32, %arg1: i32, %arg2: i32) -> (i32, i32, i32) {
    %c0_i32 = arith.constant 0 : i32
    %c0_i32_0 = arith.constant 0 : i32
    return %arg0, %arg1, %c0_i32 : i32, i32, i32
  }
  func.func @transform_1(%arg0: i32, %arg1: i32, %arg2: i32) -> (i32, i32, i32) {
    %c0_i32 = arith.constant 0 : i32
    %c0_i32_0 = arith.constant 0 : i32
    %c0_i32_1 = arith.constant 0 : i32
    return %arg0, %c0_i32, %c0_i32_0 : i32, i32, i32
  }
  func.func @transform_2(%arg0: i32, %arg1: i32, %arg2: i32) -> (i32, i32, i32) {
    %c0_i32 = arith.constant 0 : i32
    %c0_i32_0 = arith.constant 0 : i32
    return %arg0, %arg1, %c0_i32 : i32, i32, i32
  }
  func.func @transform_3(%arg0: i32, %arg1: i32, %arg2: i32) -> (i32, i32, i32) {
    %c0_i32 = arith.constant 0 : i32
    %c0_i32_0 = arith.constant 0 : i32
    %c0_i32_1 = arith.constant 0 : i32
    %c0_i32_2 = arith.constant 0 : i32
    return %c0_i32, %c0_i32_0, %c0_i32_1 : i32, i32, i32
  }
  func.func @transform_4(%arg0: i32, %arg1: i32, %arg2: i32) -> (i32, i32) {
    %c0_i32 = arith.constant 0 : i32
    %c0_i32_0 = arith.constant 0 : i32
    %c0_i32_1 = arith.constant 0 : i32
    return %c0_i32, %c0_i32_0 : i32, i32
  }
  func.func @transform_5(%arg0: i32, %arg1: i32, %arg2: i32) -> (i32, i32) {
    %c0_i32 = arith.constant 0 : i32
    %c0_i32_0 = arith.constant 0 : i32
    %c0_i32_1 = arith.constant 0 : i32
    return %c0_i32, %c0_i32_0 : i32, i32
  }
  func.func @transform_6(%arg0: i32, %arg1: i32, %arg2: i32) -> (i32, i32) {
    %c0_i32 = arith.constant 0 : i32
    %c0_i32_0 = arith.constant 0 : i32
    %c0_i32_1 = arith.constant 0 : i32
    return %c0_i32, %c0_i32_0 : i32, i32
  }
  func.func @transform_7(%arg0: i32, %arg1: i32, %arg2: i32) -> (i32, i32) {
    %c0_i32 = arith.constant 0 : i32
    %c0_i32_0 = arith.constant 0 : i32
    %c0_i32_1 = arith.constant 0 : i32
    return %c0_i32, %c0_i32_0 : i32, i32
  }
  func.func @transform_8(%arg0: i32, %arg1: i32, %arg2: i32) -> (i32, i32) {
    %c0_i32 = arith.constant 0 : i32
    %c0_i32_0 = arith.constant 0 : i32
    %c0_i32_1 = arith.constant 0 : i32
    return %c0_i32, %c0_i32_0 : i32, i32
  }
  func.func @transform_9(%arg0: i32, %arg1: i32, %arg2: i32) -> (i32, i32) {
    %c0_i32 = arith.constant 0 : i32
    %c0_i32_0 = arith.constant 0 : i32
    %c0_i32_1 = arith.constant 0 : i32
    return %c0_i32, %c0_i32_0 : i32, i32
  }
  func.func @transform_10(%arg0: i32, %arg1: i32, %arg2: i32) -> (i32, i32) {
    %c0_i32 = arith.constant 0 : i32
    %c0_i32_0 = arith.constant 0 : i32
    %c0_i32_1 = arith.constant 0 : i32
    return %c0_i32, %c0_i32_0 : i32, i32
  }
  func.func @transform_11(%arg0: i32, %arg1: i32, %arg2: i32) -> (i32, i32) {
    %c0_i32 = arith.constant 0 : i32
    %c0_i32_0 = arith.constant 0 : i32
    return %c0_i32, %arg2 : i32, i32
  }
  func.func @transform_12(%arg0: i32, %arg1: i32, %arg2: i32) -> (i32, i32) {
    %c0_i32 = arith.constant 0 : i32
    %c0_i32_0 = arith.constant 0 : i32
    return %arg2, %c0_i32 : i32, i32
  }
  func.func @transform_13(%arg0: i32, %arg1: i32, %arg2: i32) -> i32 {
    %c0_i32 = arith.constant 0 : i32
    %c0_i32_0 = arith.constant 0 : i32
    return %c0_i32 : i32
  }
  func.func @transform_14(%arg0: i32, %arg1: i32, %arg2: i32) -> (i32, i32, i32) {
    %c0_i32 = arith.constant 0 : i32
    %c0_i32_0 = arith.constant 0 : i32
    return %arg0, %arg1, %c0_i32 : i32, i32, i32
  }
}

</mosaic_0001>

<llo_original>
// kernel: tpu_custom_call.1
$region0: #{tpu_custom_call.1}
  #allocation0 [shape = 'u32[]', space=smem, size = 0x4, offset = 0x4, fixed_abs, tag = 'smem constant byte address 0x4 - core index']
  #allocation1 [shape = 'u32[144,128]{1,0:T(1,128)}', space=vmem, size = 0x12000, scoped, tag = 'internal scratch']
  #allocation2 [shape = 'f32[8,32]{1,0:T(8,128)}', space=vmem, size = 0x1000, scoped, tag = 'scratch operand']
  #allocation3 [shape = 'bf16[8,32]{1,0:T(8,128)(2,1)}', space=vmem, size = 0x800, scoped, tag = 'scratch operand']
  %s0 = inlined_call_operand.vmem [shape: bf16[2,8,32], index: 0, kind: input, shape index: {}]
  %s1 = inlined_call_operand.vmem [shape: bf16[2,8,16], index: 1, kind: input, shape index: {}]
  %s2 = inlined_call_operand.vmem [shape: s32[2,8,1], index: 2, kind: input, shape index: {}]
  %s3 = inlined_call_operand.vmem [shape: s32[1,1,8], index: 3, kind: input, shape index: {}]
  %s4 = inlined_call_operand.vmem [shape: f32[1,32], index: 4, kind: input, shape index: {}]
  %s5 = inlined_call_operand.vmem [shape: f32[1,32], index: 5, kind: input, shape index: {}]
  %s6 = inlined_call_operand.vmem [shape: bf16[32,16], index: 6, kind: input, shape index: {}]
  %s7 = inlined_call_operand.vmem [shape: bf16[16,32], index: 7, kind: input, shape index: {}]
  %s8 = inlined_call_operand.vmem [shape: bf16[16,32], index: 8, kind: input, shape index: {}]
  %s9 = inlined_call_operand.vmem [shape: f32[1,32], index: 9, kind: input, shape index: {}]
  %s10 = inlined_call_operand.vmem [shape: f32[1,32], index: 10, kind: input, shape index: {}]
  %s11 = inlined_call_operand.vmem [shape: bf16[32,128], index: 11, kind: input, shape index: {}]
  %s12 = inlined_call_operand.vmem [shape: bf16[128,32], index: 12, kind: input, shape index: {}]
  %s13 = inlined_call_operand.vmem [shape: f32[2], index: 13, kind: input, shape index: {}]
  %s14 = inlined_call_operand.hbm [shape: f32[2,8,32], index: 14, kind: output, shape index: {}]
  %s15 = sld [smem:[#allocation0]]
  $region101: #{tpu_custom_call.1} parent=0
    _
  %s17 = ssub.s32 1, %s15
  %s18 = scalar_select 0, %s17, %s15
  $region1: #{tpu_custom_call.1} parent=0
    #allocation4 [shape = 'u8[512]{0}', space=smem, size = 0x200, scoped, tag = 'input window, operand 13, single buffered']
    #allocation5 [shape = 's32[2]{0}', space=sflag, size = 0x8, scoped, tag = 'scoped memory for tpu_custom_call.1']
    #allocation6 [shape = 's32[2]{0}', space=sflag, size = 0x8, scoped, tag = 'scoped memory for tpu_custom_call.1']
    #allocation7 [shape = 'u8[8192]{0}', space=vmem, size = 0x2000, scoped, tag = 'output window, operand 0']
    %19 = vsyncpa [#allocation6], 0
    %20 = vsyncpa [#allocation5], 0
    %s21 = scalar_lea.sflag [#allocation5], 1
    %22 = vsyncpa %s21, 0
    loop: start=0, step=1, limit=4
    $region2: #{tpu_custom_call.1} parent=1 // loop_pre_header
      _
    $region3: #{tpu_custom_call.1} parent=1 // loop_header
      %s24 = sphi 0, %s28
      %p25 = scmp.ge.s32.totalorder %s24, 4
      %s31 = sphi 0, %s50
      %s32 = sphi 0, %s46
      %s33 = sphi 0, %s42
      %s34 = sphi 0, %s31
      %s35 = sphi 0, %s32
      %s36 = sphi 0, %s33
      %s37 = sphi 0, %s34
      %s38 = sphi 0, %s35
      %s39 = sphi 0, %s36
      %s55 = sphi 0, %s57
      %s58 = sphi 0, %s55
      %s59 = sphi 0, %s58
      %s75 = sphi 0, %s59
      %s81 = sphi 0, %s83
      %s84 = sphi 0, %s81
      %s85 = sphi 0, %s84
      %s101 = sphi 0, %s85
      %s109 = sphi 0, %s111
      %s112 = sphi 0, %s109
      %s113 = sphi 0, %s112
      %s129 = sphi 0, %s113
      %s133 = sphi 0, %s133
      %s135 = sphi 0, %s133
      %s136 = sphi 0, %s135
      %s150 = sphi 0, %s136
      %s154 = sphi 0, %s154
      %s156 = sphi 0, %s154
      %s157 = sphi 0, %s156
      %s171 = sphi 0, %s157
      %s175 = sphi 0, %s175
      %s177 = sphi 0, %s175
      %s178 = sphi 0, %s177
      %s192 = sphi 0, %s178
      %s196 = sphi 0, %s196
      %s198 = sphi 0, %s196
      %s199 = sphi 0, %s198
      %s213 = sphi 0, %s199
      %s217 = sphi 0, %s217
      %s219 = sphi 0, %s217
      %s220 = sphi 0, %s219
      %s234 = sphi 0, %s220
      %s238 = sphi 0, %s238
      %s240 = sphi 0, %s238
      %s241 = sphi 0, %s240
      %s255 = sphi 0, %s241
      %s259 = sphi 0, %s259
      %s261 = sphi 0, %s259
      %s262 = sphi 0, %s261
      %s276 = sphi 0, %s262
      %s280 = sphi 0, %s280
      %s282 = sphi 0, %s280
      %s283 = sphi 0, %s282
      %s297 = sphi 0, %s283
      %s303 = sphi 0, %s305
      %s306 = sphi 0, %s303
      %s307 = sphi 0, %s306
      %s323 = sphi 0, %s307
      %s329 = sphi 0, %s331
      %s332 = sphi 0, %s329
      %s333 = sphi 0, %s332
      %s349 = sphi 0, %s333
      %s353 = sphi 0, %s353
      %s355 = sphi 0, %s353
      %s356 = sphi 0, %s355
      %s370 = sphi 0, %s356
      %s378 = sphi 0, %s380
      %s381 = sphi 0, %s378
      %s382 = sphi 0, %s381
      %s398 = sphi 0, %s382
    $region4: #{tpu_custom_call.1} parent=1 // loop_header_branch
      %27 = sbr.rel (%p25) target = $region8
    $region5: #{tpu_custom_call.1} parent=1 // loop_body
      %s29 = ssub.s32 %s24, 1
      %s30 = ssub.s32 %s24, 2
      %s40 = sadd.s32 1, %s33
      %p41 = scmp.ge.s32.totalorder %s40, 1
      %s42 = scalar_select %p41, 0, %s40
      %s43 = sadd.s32 1, %s32
      %s44 = scalar_select %p41, %s43, %s32
      %p45 = scmp.ge.s32.totalorder %s44, 1
      %s46 = scalar_select %p45, 0, %s44
      %s47 = sadd.s32 1, %s31
      %s48 = scalar_select %p45, %s47, %s31
      %p49 = scmp.ge.s32.totalorder %s48, 2
      %s50 = scalar_select %p49, 0, %s48
      %s51 = ssub.s32 %s31, %s50
      %s52 = ssub.s32 %s32, %s46
      %s53 = sor.u32 %s51, %s52
      %p54 = scmp.eq.s32.totalorder %s53, 0
      %s56 = sadd.s32 %s55, 1
      %s57 = scalar_select %p54, %s55, %s56
      %p60 = pneg %p54
      %p61 = scmp.eq.s32.totalorder %s24, 1
      %p62 = por %p60, %p61
      %p63 = scmp.ne.s32.totalorder %s55, %s58
      %p64 = scmp.eq.s32.totalorder %s24, 0
      %p65 = por %p63, %p64
      %p66 = scmp.ne.s32.totalorder %s55, %s58
      %p67 = scmp.eq.s32.totalorder %s29, 1
      %p68 = por %p66, %p67
      %p69 = scmp.ne.s32.totalorder %s58, %s59
      %p70 = scmp.eq.s32.totalorder %s29, 0
      %p71 = por %p69, %p70
      %p72 = scmp.ne.s32.totalorder %s58, %s59
      %p73 = scmp.eq.s32.totalorder %s30, 1
      %p74 = por %p72, %p73
      %p76 = scmp.ne.s32.totalorder %s59, %s75
      %p77 = scmp.eq.s32.totalorder %s30, 0
      %p78 = por %p76, %p77
      %s79 = ssub.s32 %s31, %s50
      %p80 = scmp.eq.s32.totalorder %s79, 0
      %s82 = sadd.s32 %s81, 1
      %s83 = scalar_select %p80, %s81, %s82
      %p86 = pneg %p80
      %p87 = scmp.eq.s32.totalorder %s24, 1
      %p88 = por %p86, %p87
      %p89 = scmp.ne.s32.totalorder %s81, %s84
      %p90 = scmp.eq.s32.totalorder %s24, 0
      %p91 = por %p89, %p90
      %p92 = scmp.ne.s32.totalorder %s81, %s84
      %p93 = scmp.eq.s32.totalorder %s29, 1
      %p94 = por %p92, %p93
      %p95 = scmp.ne.s32.totalorder %s84, %s85
      %p96 = scmp.eq.s32.totalorder %s29, 0
      %p97 = por %p95, %p96
      %p98 = scmp.ne.s32.totalorder %s84, %s85
      %p99 = scmp.eq.s32.totalorder %s30, 1
      %p100 = por %p98, %p99
      %p102 = scmp.ne.s32.totalorder %s85, %s101
      %p103 = scmp.eq.s32.totalorder %s30, 0
      %p104 = por %p102, %p103
      %s105 = ssub.s32 %s31, %s50
      %s106 = ssub.s32 %s32, %s46
      %s107 = sor.u32 %s105, %s106
      %p108 = scmp.eq.s32.totalorder %s107, 0
      %s110 = sadd.s32 %s109, 1
      %s111 = scalar_select %p108, %s109, %s110
      %p114 = pneg %p108
      %p115 = scmp.eq.s32.totalorder %s24, 1
      %p116 = por %p114, %p115
      %p117 = scmp.ne.s32.totalorder %s109, %s112
      %p118 = scmp.eq.s32.totalorder %s24, 0
      %p119 = por %p117, %p118
      %p120 = scmp.ne.s32.totalorder %s109, %s112
      %p121 = scmp.eq.s32.totalorder %s29, 1
      %p122 = por %p120, %p121
      %p123 = scmp.ne.s32.totalorder %s112, %s113
      %p124 = scmp.eq.s32.totalorder %s29, 0
      %p125 = por %p123, %p124
      %p126 = scmp.ne.s32.totalorder %s112, %s113
      %p127 = scmp.eq.s32.totalorder %s30, 1
      %p128 = por %p126, %p127
      %p130 = scmp.ne.s32.totalorder %s113, %s129
      %p131 = scmp.eq.s32.totalorder %s30, 0
      %p132 = por %p130, %p131
      %s134 = sadd.s32 %s133, 1
      %p137 = scmp.eq.s32.totalorder %s24, 1
      %p138 = scmp.ne.s32.totalorder %s133, %s135
      %p139 = scmp.eq.s32.totalorder %s24, 0
      %p140 = por %p138, %p139
      %p141 = scmp.ne.s32.totalorder %s133, %s135
      %p142 = scmp.eq.s32.totalorder %s29, 1
      %p143 = por %p141, %p142
      %p144 = scmp.ne.s32.totalorder %s135, %s136
      %p145 = scmp.eq.s32.totalorder %s29, 0
      %p146 = por %p144, %p145
      %p147 = scmp.ne.s32.totalorder %s135, %s136
      %p148 = scmp.eq.s32.totalorder %s30, 1
      %p149 = por %p147, %p148
      %p151 = scmp.ne.s32.totalorder %s136, %s150
      %p152 = scmp.eq.s32.totalorder %s30, 0
      %p153 = por %p151, %p152
      %s155 = sadd.s32 %s154, 1
      %p158 = scmp.eq.s32.totalorder %s24, 1
      %p159 = scmp.ne.s32.totalorder %s154, %s156
      %p160 = scmp.eq.s32.totalorder %s24, 0
      %p161 = por %p159, %p160
      %p162 = scmp.ne.s32.totalorder %s154, %s156
      %p163 = scmp.eq.s32.totalorder %s29, 1
      %p164 = por %p162, %p163
      %p165 = scmp.ne.s32.totalorder %s156, %s157
      %p166 = scmp.eq.s32.totalorder %s29, 0
      %p167 = por %p165, %p166
      %p168 = scmp.ne.s32.totalorder %s156, %s157
      %p169 = scmp.eq.s32.totalorder %s30, 1
      %p170 = por %p168, %p169
      %p172 = scmp.ne.s32.totalorder %s157, %s171
      %p173 = scmp.eq.s32.totalorder %s30, 0
      %p174 = por %p172, %p173
      %s176 = sadd.s32 %s175, 1
      %p179 = scmp.eq.s32.totalorder %s24, 1
      %p180 = scmp.ne.s32.totalorder %s175, %s177
      %p181 = scmp.eq.s32.totalorder %s24, 0
      %p182 = por %p180, %p181
      %p183 = scmp.ne.s32.totalorder %s175, %s177
      %p184 = scmp.eq.s32.totalorder %s29, 1
      %p185 = por %p183, %p184
      %p186 = scmp.ne.s32.totalorder %s177, %s178
      %p187 = scmp.eq.s32.totalorder %s29, 0
      %p188 = por %p186, %p187
      %p189 = scmp.ne.s32.totalorder %s177, %s178
      %p190 = scmp.eq.s32.totalorder %s30, 1
      %p191 = por %p189, %p190
      %p193 = scmp.ne.s32.totalorder %s178, %s192
      %p194 = scmp.eq.s32.totalorder %s30, 0
      %p195 = por %p193, %p194
      %s197 = sadd.s32 %s196, 1
      %p200 = scmp.eq.s32.totalorder %s24, 1
      %p201 = scmp.ne.s32.totalorder %s196, %s198
      %p202 = scmp.eq.s32.totalorder %s24, 0
      %p203 = por %p201, %p202
      %p204 = scmp.ne.s32.totalorder %s196, %s198
      %p205 = scmp.eq.s32.totalorder %s29, 1
      %p206 = por %p204, %p205
      %p207 = scmp.ne.s32.totalorder %s198, %s199
      %p208 = scmp.eq.s32.totalorder %s29, 0
      %p209 = por %p207, %p208
      %p210 = scmp.ne.s32.totalorder %s198, %s199
      %p211 = scmp.eq.s32.totalorder %s30, 1
      %p212 = por %p210, %p211
      %p214 = scmp.ne.s32.totalorder %s199, %s213
      %p215 = scmp.eq.s32.totalorder %s30, 0
      %p216 = por %p214, %p215
      %s218 = sadd.s32 %s217, 1
      %p221 = scmp.eq.s32.totalorder %s24, 1
      %p222 = scmp.ne.s32.totalorder %s217, %s219
      %p223 = scmp.eq.s32.totalorder %s24, 0
      %p224 = por %p222, %p223
      %p225 = scmp.ne.s32.totalorder %s217, %s219
      %p226 = scmp.eq.s32.totalorder %s29, 1
      %p227 = por %p225, %p226
      %p228 = scmp.ne.s32.totalorder %s219, %s220
      %p229 = scmp.eq.s32.totalorder %s29, 0
      %p230 = por %p228, %p229
      %p231 = scmp.ne.s32.totalorder %s219, %s220
      %p232 = scmp.eq.s32.totalorder %s30, 1
      %p233 = por %p231, %p232
      %p235 = scmp.ne.s32.totalorder %s220, %s234
      %p236 = scmp.eq.s32.totalorder %s30, 0
      %p237 = por %p235, %p236
      %s239 = sadd.s32 %s238, 1
      %p242 = scmp.eq.s32.totalorder %s24, 1
      %p243 = scmp.ne.s32.totalorder %s238, %s240
      %p244 = scmp.eq.s32.totalorder %s24, 0
      %p245 = por %p243, %p244
      %p246 = scmp.ne.s32.totalorder %s238, %s240
      %p247 = scmp.eq.s32.totalorder %s29, 1
      %p248 = por %p246, %p247
      %p249 = scmp.ne.s32.totalorder %s240, %s241
      %p250 = scmp.eq.s32.totalorder %s29, 0
      %p251 = por %p249, %p250
      %p252 = scmp.ne.s32.totalorder %s240, %s241
      %p253 = scmp.eq.s32.totalorder %s30, 1
      %p254 = por %p252, %p253
      %p256 = scmp.ne.s32.totalorder %s241, %s255
      %p257 = scmp.eq.s32.totalorder %s30, 0
      %p258 = por %p256, %p257
      %s260 = sadd.s32 %s259, 1
      %p263 = scmp.eq.s32.totalorder %s24, 1
      %p264 = scmp.ne.s32.totalorder %s259, %s261
      %p265 = scmp.eq.s32.totalorder %s24, 0
      %p266 = por %p264, %p265
      %p267 = scmp.ne.s32.totalorder %s259, %s261
      %p268 = scmp.eq.s32.totalorder %s29, 1
      %p269 = por %p267, %p268
      %p270 = scmp.ne.s32.totalorder %s261, %s262
      %p271 = scmp.eq.s32.totalorder %s29, 0
      %p272 = por %p270, %p271
      %p273 = scmp.ne.s32.totalorder %s261, %s262
      %p274 = scmp.eq.s32.totalorder %s30, 1
      %p275 = por %p273, %p274
      %p277 = scmp.ne.s32.totalorder %s262, %s276
      %p278 = scmp.eq.s32.totalorder %s30, 0
      %p279 = por %p277, %p278
      %s281 = sadd.s32 %s280, 1
      %p284 = scmp.eq.s32.totalorder %s24, 1
      %p285 = scmp.ne.s32.totalorder %s280, %s282
      %p286 = scmp.eq.s32.totalorder %s24, 0
      %p287 = por %p285, %p286
      %p288 = scmp.ne.s32.totalorder %s280, %s282
      %p289 = scmp.eq.s32.totalorder %s29, 1
      %p290 = por %p288, %p289
      %p291 = scmp.ne.s32.totalorder %s282, %s283
      %p292 = scmp.eq.s32.totalorder %s29, 0
      %p293 = por %p291, %p292
      %p294 = scmp.ne.s32.totalorder %s282, %s283
      %p295 = scmp.eq.s32.totalorder %s30, 1
      %p296 = por %p294, %p295
      %p298 = scmp.ne.s32.totalorder %s283, %s297
      %p299 = scmp.eq.s32.totalorder %s30, 0
      %p300 = por %p298, %p299
      %s301 = ssub.s32 %s33, %s42
      %p302 = scmp.eq.s32.totalorder %s301, 0
      %s304 = sadd.s32 %s303, 1
      %s305 = scalar_select %p302, %s303, %s304
      %p308 = pneg %p302
      %p309 = scmp.eq.s32.totalorder %s24, 1
      %p310 = por %p308, %p309
      %p311 = scmp.ne.s32.totalorder %s303, %s306
      %p312 = scmp.eq.s32.totalorder %s24, 0
      %p313 = por %p311, %p312
      %p314 = scmp.ne.s32.totalorder %s303, %s306
      %p315 = scmp.eq.s32.totalorder %s29, 1
      %p316 = por %p314, %p315
      %p317 = scmp.ne.s32.totalorder %s306, %s307
      %p318 = scmp.eq.s32.totalorder %s29, 0
      %p319 = por %p317, %p318
      %p320 = scmp.ne.s32.totalorder %s306, %s307
      %p321 = scmp.eq.s32.totalorder %s30, 1
      %p322 = por %p320, %p321
      %p324 = scmp.ne.s32.totalorder %s307, %s323
      %p325 = scmp.eq.s32.totalorder %s30, 0
      %p326 = por %p324, %p325
      %s327 = ssub.s32 %s33, %s42
      %p328 = scmp.eq.s32.totalorder %s327, 0
      %s330 = sadd.s32 %s329, 1
      %s331 = scalar_select %p328, %s329, %s330
      %p334 = pneg %p328
      %p335 = scmp.eq.s32.totalorder %s24, 1
      %p336 = por %p334, %p335
      %p337 = scmp.ne.s32.totalorder %s329, %s332
      %p338 = scmp.eq.s32.totalorder %s24, 0
      %p339 = por %p337, %p338
      %p340 = scmp.ne.s32.totalorder %s329, %s332
      %p341 = scmp.eq.s32.totalorder %s29, 1
      %p342 = por %p340, %p341
      %p343 = scmp.ne.s32.totalorder %s332, %s333
      %p344 = scmp.eq.s32.totalorder %s29, 0
      %p345 = por %p343, %p344
      %p346 = scmp.ne.s32.totalorder %s332, %s333
      %p347 = scmp.eq.s32.totalorder %s30, 1
      %p348 = por %p346, %p347
      %p350 = scmp.ne.s32.totalorder %s333, %s349
      %p351 = scmp.eq.s32.totalorder %s30, 0
      %p352 = por %p350, %p351
      %s354 = sadd.s32 %s353, 1
      %p357 = scmp.eq.s32.totalorder %s24, 1
      %p358 = scmp.ne.s32.totalorder %s353, %s355
      %p359 = scmp.eq.s32.totalorder %s24, 0
      %p360 = por %p358, %p359
      %p361 = scmp.ne.s32.totalorder %s353, %s355
      %p362 = scmp.eq.s32.totalorder %s29, 1
      %p363 = por %p361, %p362
      %p364 = scmp.ne.s32.totalorder %s355, %s356
      %p365 = scmp.eq.s32.totalorder %s29, 0
      %p366 = por %p364, %p365
      %p367 = scmp.ne.s32.totalorder %s355, %s356
      %p368 = scmp.eq.s32.totalorder %s30, 1
      %p369 = por %p367, %p368
      %p371 = scmp.ne.s32.totalorder %s356, %s370
      %p372 = scmp.eq.s32.totalorder %s30, 0
      %p373 = por %p371, %p372
      %s374 = ssub.s32 %s31, %s50
      %s375 = ssub.s32 %s32, %s46
      %s376 = sor.u32 %s374, %s375
      %p377 = scmp.eq.s32.totalorder %s376, 0
      %s379 = sadd.s32 %s378, 1
      %s380 = scalar_select %p377, %s378, %s379
      %p383 = pneg %p377
      %p384 = scmp.eq.s32.totalorder %s24, 1
      %p385 = por %p383, %p384
      %p386 = scmp.ne.s32.totalorder %s378, %s381
      %p387 = scmp.eq.s32.totalorder %s24, 0
      %p388 = por %p386, %p387
      %p389 = scmp.ne.s32.totalorder %s378, %s381
      %p390 = scmp.eq.s32.totalorder %s29, 1
      %p391 = por %p389, %p390
      %p392 = scmp.ne.s32.totalorder %s381, %s382
      %p393 = scmp.eq.s32.totalorder %s29, 0
      %p394 = por %p392, %p393
      %p395 = scmp.ne.s32.totalorder %s381, %s382
      %p396 = scmp.eq.s32.totalorder %s30, 1
      %p397 = por %p395, %p396
      %p399 = scmp.ne.s32.totalorder %s382, %s398
      %p400 = scmp.eq.s32.totalorder %s30, 0
      %p401 = por %p399, %p400
      %p402 = scmp.le.s32.totalorder 1, %s24
      %p403 = scmp.lt.s32.totalorder %s24, 3
      %p404 = pnand %p402, %p403
      %p405 = pneg %p404
      // Predicated region
      $region9: #{tpu_custom_call.1} parent=5 // pred_check
        _
      $region10: #{tpu_custom_call.1} parent=5 // pred_check_branch
        %407 = sbr.rel (%p404) target = $region12
      $region11: #{tpu_custom_call.1} parent=5 // pred_region
        %s408 = ssub.s32 %s24, 1
        // Predicated region
        $region13: #{tpu_custom_call.1} parent=11 // pred_check
          %p409 = pneg %p146
        $region14: #{tpu_custom_call.1} parent=11 // pred_check_branch
          %411 = sbr.rel (%p409) target = $region16
        $region15: #{tpu_custom_call.1} parent=11 // pred_region
          _
        $region16: #{tpu_custom_call.1} parent=11 // pred_fallthru
          _
        // Predicated region
        $region17: #{tpu_custom_call.1} parent=11 // pred_check
          %p412 = pneg %p167
        $region18: #{tpu_custom_call.1} parent=11 // pred_check_branch
          %414 = sbr.rel (%p412) target = $region20
        $region19: #{tpu_custom_call.1} parent=11 // pred_region
          _
        $region20: #{tpu_custom_call.1} parent=11 // pred_fallthru
          _
        // Predicated region
        $region21: #{tpu_custom_call.1} parent=11 // pred_check
          %p415 = pneg %p188
        $region22: #{tpu_custom_call.1} parent=11 // pred_check_branch
          %417 = sbr.rel (%p415) target = $region24
        $region23: #{tpu_custom_call.1} parent=11 // pred_region
          _
        $region24: #{tpu_custom_call.1} parent=11 // pred_fallthru
          _
        // Predicated region
        $region25: #{tpu_custom_call.1} parent=11 // pred_check
          %p418 = pneg %p209
        $region26: #{tpu_custom_call.1} parent=11 // pred_check_branch
          %420 = sbr.rel (%p418) target = $region28
        $region27: #{tpu_custom_call.1} parent=11 // pred_region
          _
        $region28: #{tpu_custom_call.1} parent=11 // pred_fallthru
          _
        // Predicated region
        $region29: #{tpu_custom_call.1} parent=11 // pred_check
          %p421 = pneg %p230
        $region30: #{tpu_custom_call.1} parent=11 // pred_check_branch
          %423 = sbr.rel (%p421) target = $region32
        $region31: #{tpu_custom_call.1} parent=11 // pred_region
          _
        $region32: #{tpu_custom_call.1} parent=11 // pred_fallthru
          _
        // Predicated region
        $region33: #{tpu_custom_call.1} parent=11 // pred_check
          %p424 = pneg %p251
        $region34: #{tpu_custom_call.1} parent=11 // pred_check_branch
          %426 = sbr.rel (%p424) target = $region36
        $region35: #{tpu_custom_call.1} parent=11 // pred_region
          _
        $region36: #{tpu_custom_call.1} parent=11 // pred_fallthru
          _
        // Predicated region
        $region37: #{tpu_custom_call.1} parent=11 // pred_check
          %p427 = pneg %p272
        $region38: #{tpu_custom_call.1} parent=11 // pred_check_branch
          %429 = sbr.rel (%p427) target = $region40
        $region39: #{tpu_custom_call.1} parent=11 // pred_region
          _
        $region40: #{tpu_custom_call.1} parent=11 // pred_fallthru
          _
        // Predicated region
        $region41: #{tpu_custom_call.1} parent=11 // pred_check
          %p430 = pneg %p293
        $region42: #{tpu_custom_call.1} parent=11 // pred_check_branch
          %432 = sbr.rel (%p430) target = $region44
        $region43: #{tpu_custom_call.1} parent=11 // pred_region
          _
        $region44: #{tpu_custom_call.1} parent=11 // pred_fallthru
          _
        // Predicated region
        $region45: #{tpu_custom_call.1} parent=11 // pred_check
          %p433 = pneg %p319
        $region46: #{tpu_custom_call.1} parent=11 // pred_check_branch
          %435 = sbr.rel (%p433) target = $region48
        $region47: #{tpu_custom_call.1} parent=11 // pred_region
          %p436 = scmp.lt.s32.totalorder %s36, 0
          %s437 = scalar_select %p436, %s36, 0
          %s438 = smul.addr %s437, 4
          %s439 = scalar_lea.vmem %s11, %s438
        $region48: #{tpu_custom_call.1} parent=11 // pred_fallthru
          _
        // Predicated region
        $region49: #{tpu_custom_call.1} parent=11 // pred_check
          %p440 = pneg %p345
        $region50: #{tpu_custom_call.1} parent=11 // pred_check_branch
          %442 = sbr.rel (%p440) target = $region52
        $region51: #{tpu_custom_call.1} parent=11 // pred_region
          %s443 = smul.u32 16, %s36
          %p444 = scmp.lt.s32.totalorder %s443, 15
          %s445 = scalar_select %p444, %s443, 15
          %s446 = smul.addr %s445, 4
          %s447 = scalar_lea.vmem %s12, %s446
          %s448 = smul.u32 16, %s36
        $region52: #{tpu_custom_call.1} parent=11 // pred_fallthru
          _
        // Predicated region
        $region53: #{tpu_custom_call.1} parent=11 // pred_check
          %p449 = pneg %p366
        $region54: #{tpu_custom_call.1} parent=11 // pred_check_branch
          %451 = sbr.rel (%p449) target = $region56
        $region55: #{tpu_custom_call.1} parent=11 // pred_region
          %s453 = ssub.s32 16, 16
          %454 = vsyncadd [#allocation6], %s453
          %s456 = sshll.u32 %s13, 4
          %s457 = int_to_ptr.vmem [resolvable:$true] %s456
          %459 = dma.vmem_to_smem %s457, 16, [#allocation4], [#allocation6]
        $region56: #{tpu_custom_call.1} parent=11 // pred_fallthru
          _
      $region12: #{tpu_custom_call.1} parent=5 // pred_fallthru
        _
      %p460 = scmp.lt.s32.totalorder %s24, 2
      // Predicated region
      $region57: #{tpu_custom_call.1} parent=5 // pred_check
        %p461 = pneg %p460
      $region58: #{tpu_custom_call.1} parent=5 // pred_check_branch
        %463 = sbr.rel (%p461) target = $region60
      $region59: #{tpu_custom_call.1} parent=5 // pred_region
        // Predicated region
        $region61: #{tpu_custom_call.1} parent=59 // pred_check
          %p464 = pneg %p65
        $region62: #{tpu_custom_call.1} parent=59 // pred_check_branch
          %466 = sbr.rel (%p464) target = $region64
        $region63: #{tpu_custom_call.1} parent=59 // pred_region
          %p467 = scmp.lt.s32.totalorder %s31, 1
          %s468 = scalar_select %p467, %s31, 1
          %p469 = scmp.lt.s32.totalorder %s32, 0
          %s470 = scalar_select %p469, %s32, 0
          %s471 = sadd.s32 %s470, %s468
          %s472 = smul.addr %s471, 4
          %s473 = scalar_lea.vmem %s0, %s472
        $region64: #{tpu_custom_call.1} parent=59 // pred_fallthru
          _
        // Predicated region
        $region65: #{tpu_custom_call.1} parent=59 // pred_check
          %p474 = pneg %p91
        $region66: #{tpu_custom_call.1} parent=59 // pred_check_branch
          %476 = sbr.rel (%p474) target = $region68
        $region67: #{tpu_custom_call.1} parent=59 // pred_region
          %p477 = scmp.lt.s32.totalorder %s31, 1
          %s478 = scalar_select %p477, %s31, 1
          %s479 = smul.addr %s478, 4
          %s480 = scalar_lea.vmem %s1, %s479
        $region68: #{tpu_custom_call.1} parent=59 // pred_fallthru
          _
        // Predicated region
        $region69: #{tpu_custom_call.1} parent=59 // pred_check
          %p481 = pneg %p119
        $region70: #{tpu_custom_call.1} parent=59 // pred_check_branch
          %483 = sbr.rel (%p481) target = $region72
        $region71: #{tpu_custom_call.1} parent=59 // pred_region
          %p484 = scmp.lt.s32.totalorder %s31, 1
          %s485 = scalar_select %p484, %s31, 1
          %p486 = scmp.lt.s32.totalorder %s32, 0
          %s487 = scalar_select %p486, %s32, 0
          %s488 = sadd.s32 %s487, %s485
          %s489 = smul.addr %s488, 8
          %s490 = scalar_lea.vmem %s2, %s489
        $region72: #{tpu_custom_call.1} parent=59 // pred_fallthru
          _
      $region60: #{tpu_custom_call.1} parent=5 // pred_fallthru
        _
      %p491 = scmp.le.s32.totalorder 1, %s24
      %p492 = scmp.lt.s32.totalorder %s24, 3
      %p493 = pnand %p491, %p492
      %p494 = pneg %p493
      // Predicated region
      $region73: #{tpu_custom_call.1} parent=5 // pred_check
        _
      $region74: #{tpu_custom_call.1} parent=5 // pred_check_branch
        %496 = sbr.rel (%p493) target = $region76
      $region75: #{tpu_custom_call.1} parent=5 // pred_region
        %s497 = ssub.s32 %s24, 1
        // Predicated region
        $region77: #{tpu_custom_call.1} parent=75 // pred_check
          %p498 = pneg %p366
        $region78: #{tpu_custom_call.1} parent=75 // pred_check_branch
          %500 = sbr.rel (%p498) target = $region80
        $region79: #{tpu_custom_call.1} parent=75 // pred_region
          %501 = dma.done [#allocation6], 16
        $region80: #{tpu_custom_call.1} parent=75 // pred_fallthru
          _
        %502 = sfence
        %p503 = scmp.lt.s32.totalorder %s34, 1
        %s504 = scalar_select %p503, %s34, 1
        %p505 = scmp.lt.s32.totalorder %s35, 0
        %s506 = scalar_select %p505, %s35, 0
        %s507 = sadd.s32 %s506, %s504
        %s508 = smul.addr %s507, 4
        %s509 = scalar_lea.vmem %s0, %s508
        %p510 = pneg %p71
        %p511 = pneg %p68
        %p512 = scmp.lt.s32.totalorder %s34, 1
        %s513 = scalar_select %p512, %s34, 1
        %s514 = smul.addr %s513, 4
        %s515 = scalar_lea.vmem %s1, %s514
        %p516 = pneg %p97
        %p517 = pneg %p94
        %p518 = scmp.lt.s32.totalorder %s34, 1
        %s519 = scalar_select %p518, %s34, 1
        %p520 = scmp.lt.s32.totalorder %s35, 0
        %s521 = scalar_select %p520, %s35, 0
        %s522 = sadd.s32 %s521, %s519
        %s523 = smul.addr %s522, 8
        %s524 = scalar_lea.vmem %s2, %s523
        %p525 = pneg %p125
        %p526 = pneg %p122
        %p527 = pneg %p146
        %p528 = pneg %p143
        %p529 = pneg %p167
        %p530 = pneg %p164
        %p531 = pneg %p188
        %p532 = pneg %p185
        %p533 = pneg %p209
        %p534 = pneg %p206
        %p535 = pneg %p230
        %p536 = pneg %p227
        %p537 = pneg %p251
        %p538 = pneg %p248
        %p539 = pneg %p272
        %p540 = pneg %p269
        %p541 = pneg %p293
        %p542 = pneg %p290
        %p543 = scmp.lt.s32.totalorder %s36, 0
        %s544 = scalar_select %p543, %s36, 0
        %s545 = smul.addr %s544, 4
        %s546 = scalar_lea.vmem %s11, %s545
        %p547 = pneg %p319
        %p548 = pneg %p316
        %s549 = smul.u32 16, %s36
        %p550 = scmp.lt.s32.totalorder %s549, 15
        %s551 = scalar_select %p550, %s549, 15
        %s552 = smul.addr %s551, 4
        %s553 = scalar_lea.vmem %s12, %s552
        %p554 = pneg %p345
        %p555 = pneg %p342
        %p556 = pneg %p366
        %p557 = pneg %p363
        %p558 = pneg %p394
        %p559 = pneg %p391
        %s560 = sand.u32 %s381, 1
        %s561 = scalar_lea.sflag [#allocation5], %s560
        %s562 = sand.u32 %s381, 1
        %s563 = smul.addr %s562, 8
        %s564 = scalar_lea.vmem [#allocation7], %s563
        %p565 = scmp.lt.s32.totalorder %s34, 1
        %s566 = scalar_select %p565, %s34, 1
        %p567 = scmp.lt.s32.totalorder %s35, 0
        %s568 = scalar_select %p567, %s35, 0
        %s569 = sadd.s32 %s568, %s566
        %s570 = smul.addr %s569, 4
        %s571 = scalar_lea.vmem %s0, %s570
        %p572 = scmp.lt.s32.totalorder %s34, 1
        %s573 = scalar_select %p572, %s34, 1
        %s574 = smul.addr %s573, 4
        %s575 = scalar_lea.vmem %s1, %s574
        %p576 = scmp.lt.s32.totalorder %s34, 1
        %s577 = scalar_select %p576, %s34, 1
        %p578 = scmp.lt.s32.totalorder %s35, 0
        %s579 = scalar_select %p578, %s35, 0
        %s580 = sadd.s32 %s579, %s577
        %s581 = smul.addr %s580, 8
        %s582 = scalar_lea.vmem %s2, %s581
        %p583 = scmp.lt.s32.totalorder %s36, 0
        %s584 = scalar_select %p583, %s36, 0
        %s585 = smul.addr %s584, 4
        %s586 = scalar_lea.vmem %s11, %s585
        %s587 = smul.u32 16, %s36
        %p588 = scmp.lt.s32.totalorder %s587, 15
        %s589 = scalar_select %p588, %s587, 15
        %s590 = smul.addr %s589, 4
        %s591 = scalar_lea.vmem %s12, %s590
        %s592 = smul.u32 16, %s36
        %p594 = scmp.eq.s32.totalorder %s36, 0
        // Predicated region
        $region81: #{tpu_custom_call.1} parent=75 // pred_check
          %p595 = pneg %p594
        $region82: #{tpu_custom_call.1} parent=75 // pred_check_branch
          %597 = sbr.rel (%p595) target = $region84
        $region83: #{tpu_custom_call.1} parent=75 // pred_region
          %v598 = vld [vmem:[%s571] sm:$0xf]
          %v599 = vunpack.c.l.bf16 %v598
          %v600 = vld [vmem:[%s575] sm:$0xf]
          %v601 = vld [vmem:[%s582] sm:$0xff]
          %v602 = vld [vmem:[%s3] sm:$0x1]
          %603 = vset.pattern.permute.xlu0 0
          %604 = vperm.xlu0 %603, %v601
          %v605 = vpop.permute.xlu0 %604
          %v606 = vlaneseq
          %v607 = vshrl.u32 %v606, 7
          %v608 = vsub.s32 0, %v607
          %v609 = vrot.slane %v602, %v608
          %vm610 = vcmp.eq.s32.totalorder %v605, %v609
          %v611 = vsel %vm610, 0.0, -1e+30
          %vm612 = vcmp.ne.s32.totalorder %v601, 0
          %v613 = vsel %vm612, 1, 0
          %v614 = vcvt.s32.f32 %v613
          %v615 = vld [vmem:[%s4] sm:$0x1]
          %v616 = vld [vmem:[%s5] sm:$0x1]
          %vm617 = vcmask 261120
          %v618 = vsel %vm617, %v599, 0.0
          %619 = vadd.xlane.f32.xlu0 %v618
          %v620 = vpop.xlane.xlu0 %619
          %v621 = vrcp.pop 32.0
          %v622 = vmul.f32 %v620, %v621
          %v623 = vsub.f32 %v599, %v622
          %v624 = vmul.f32 %v623, %v623
          %v625 = vsel %vm617, %v624, 0.0
          %626 = vadd.xlane.f32.xlu0 %v625
          %v627 = vpop.xlane.xlu0 %626
          %v628 = vmul.f32 %v627, %v621
          %v629 = vadd.f32 %v628, 1e-05
          %v630 = vrsqrt.pop %v629
          %v631 = vmul.f32 %v623, %v630
          %v633 = vlaneseq
          %v634 = vshrl.u32 %v633, 7
          %v635 = vsub.s32 0, %v634
          %v636 = vrot.slane %v615, %v635
          %v638 = vmul.f32 %v631, %v636
          %v640 = vlaneseq
          %v641 = vshrl.u32 %v640, 7
          %v642 = vsub.s32 0, %v641
          %v643 = vrot.slane %v616, %v642
          %v645 = vadd.f32 %v638, %v643
          %v646 = vpack.c.bf16 %v645, %v645
          %v647 = vld [vmem:[%s6] sm:$0xf]
          %v648 = vld [vmem:[%s6 + $0x4] sm:$0xf]
          %v649 = vld [vmem:[%s6 + $0x8] sm:$0xf]
          %v650 = vld [vmem:[%s6 + $0xc] sm:$0xf]
          %v655 = vunpack.c.l.b16 %v647
          %v656 = vunpack.c.l.b16 %v648
          %v657 = vunpack.c.l.b16 %v649
          %v658 = vunpack.c.l.b16 %v650
          %v659 = vpack.c.b16 %v656, %v655
          %v660 = vpack.c.b16 %v658, %v657
          %v664 = vsel %vm617, %v646, 0
          %666 = vmatprep.subr.bf16.mxu0 0
          %667 = vmatpush1.bf16.msra.mxu0 0
          %668 = vmatprep.subr.bf16.mxu0 0
          %669 = vmatpush1.bf16.msra.mxu0 0
          %670 = vmatprep.subr.bf16.mxu0 0
          %671 = vmatpush1.bf16.msra.mxu0 0
          %672 = vmatprep.subr.bf16.mxu0 0
          %673 = vmatpush1.bf16.msra.mxu0 0
          %674 = vmatprep.subr.bf16.mxu0 0
          %675 = vmatpush1.bf16.msra.mxu0 0
          %676 = vmatprep.subr.bf16.mxu0 0
          %677 = vmatpush1.bf16.msra.mxu0 0
          %678 = vmatprep.subr.bf16.mxu0 0
          %679 = vmatpush1.bf16.msra.mxu0 %v660
          %680 = vmatprep.subr.bf16.mxu0 0
          %681 = vmatpush1.bf16.msra.mxu0 %v659
          %682 = vmatprep.subr.bf16.mxu0 0
          %683 = vmatpush2.bf16.msra.mxu0 0
          %684 = vmatprep.subr.bf16.mxu0 0
          %685 = vmatpush2.bf16.msra.mxu0 0
          %686 = vmatprep.subr.bf16.mxu0 0
          %687 = vmatpush2.bf16.msra.mxu0 0
          %688 = vmatprep.subr.bf16.mxu0 0
          %689 = vmatpush2.bf16.msra.mxu0 0
          %690 = vmatprep.subr.bf16.mxu0 0
          %691 = vmatpush2.bf16.msra.mxu0 0
          %692 = vmatprep.subr.bf16.mxu0 0
          %693 = vmatpush2.bf16.msra.mxu0 0
          %694 = vmatprep.subr.bf16.mxu0 0
          %695 = vmatpush2.bf16.msra.mxu0 0
          %696 = vmatprep.subr.bf16.mxu0 0
          %697 = vmatpush2.bf16.msra.mxu0 0
          %698 = vmatprep.mubr.bf16.mxu0 0
          %699 = vmatmul.mubr.bf16.gmra.mxu0 %v664
          %v700 = vpop.f32.mrf.mxu0
          %v701 = vadd.f32 0.0, %v700
          %v702 = vpop.f32.mrf.mxu0
          %v703 = vpop.f32.mrf.mxu0
          %v704 = vpop.f32.mrf.mxu0
          %705 = vdwg.mxu0
          %v706 = vld [vmem:[%s7] sm:$0xf]
          %v707 = vld [vmem:[%s7 + $0x4] sm:$0xf]
          %v710 = vunpack.c.l.b16 %v706
          %v711 = vunpack.c.l.b16 %v707
          %v712 = vpack.c.b16 %v711, %v710
          %vm714 = vcmask 130048
          %v716 = vsel %vm714, %v600, 0
          %718 = vmatprep.subr.bf16.mxu0 0
          %719 = vmatpush1.bf16.msra.mxu0 0
          %720 = vmatprep.subr.bf16.mxu0 0
          %721 = vmatpush1.bf16.msra.mxu0 0
          %722 = vmatprep.subr.bf16.mxu0 0
          %723 = vmatpush1.bf16.msra.mxu0 0
          %724 = vmatprep.subr.bf16.mxu0 0
          %725 = vmatpush1.bf16.msra.mxu0 0
          %726 = vmatprep.subr.bf16.mxu0 0
          %727 = vmatpush1.bf16.msra.mxu0 0
          %728 = vmatprep.subr.bf16.mxu0 0
          %729 = vmatpush1.bf16.msra.mxu0 0
          %730 = vmatprep.subr.bf16.mxu0 0
          %731 = vmatpush1.bf16.msra.mxu0 0
          %732 = vmatprep.subr.bf16.mxu0 0
          %733 = vmatpush1.bf16.msra.mxu0 %v712
          %734 = vmatprep.subr.bf16.mxu0 0
          %735 = vmatpush2.bf16.msra.mxu0 0
          %736 = vmatprep.subr.bf16.mxu0 0
          %737 = vmatpush2.bf16.msra.mxu0 0
          %738 = vmatprep.subr.bf16.mxu0 0
          %739 = vmatpush2.bf16.msra.mxu0 0
          %740 = vmatprep.subr.bf16.mxu0 0
          %741 = vmatpush2.bf16.msra.mxu0 0
          %742 = vmatprep.subr.bf16.mxu0 0
          %743 = vmatpush2.bf16.msra.mxu0 0
          %744 = vmatprep.subr.bf16.mxu0 0
          %745 = vmatpush2.bf16.msra.mxu0 0
          %746 = vmatprep.subr.bf16.mxu0 0
          %747 = vmatpush2.bf16.msra.mxu0 0
          %748 = vmatprep.subr.bf16.mxu0 0
          %749 = vmatpush2.bf16.msra.mxu0 0
          %750 = vmatprep.mubr.bf16.mxu0 0
          %751 = vmatmul.mubr.bf16.gmra.mxu0 %v716
          %v752 = vpop.f32.mrf.mxu0
          %v753 = vadd.f32 0.0, %v752
          %v754 = vpop.f32.mrf.mxu0
          %v755 = vpop.f32.mrf.mxu0
          %v756 = vpop.f32.mrf.mxu0
          %757 = vdwg.mxu0
          %759 = vrot.lane.b32.xlu0 %v701, 120
          %v760 = vpop.permute.xlu0 %759
          %v762 = vcombine.high %v701, 0.0
          %v764 = vunpack.c.l.s4 1983009808
          %v765 = vunpack.c.0.s8 %v764
          %v766 = vlaneseq
          %v767 = vshrl.u32 %v766, 7
          %v768 = vsub.s32 %v765, %v767
          %v769 = vrot.slane %v701, %v768
          %v771 = vunpack.c.l.s4 1983009808
          %v772 = vunpack.c.0.s8 %v771
          %v773 = vlaneseq
          %v774 = vshrl.u32 %v773, 7
          %v775 = vsub.s32 %v772, %v774
          %v776 = vrot.slane %v762, %v775
          %v777 = vcombine.high %v760, 0.0
          %v779 = vunpack.c.l.s4 1983009808
          %v780 = vunpack.c.0.s8 %v779
          %v781 = vlaneseq
          %v782 = vshrl.u32 %v781, 7
          %v783 = vsub.s32 %v780, %v782
          %v784 = vrot.slane %v760, %v783
          %v786 = vunpack.c.l.s4 1983009808
          %v787 = vunpack.c.0.s8 %v786
          %v788 = vlaneseq
          %v789 = vshrl.u32 %v788, 7
          %v790 = vsub.s32 %v787, %v789
          %v791 = vrot.slane %v777, %v790
          %v792 = vcombine.low %v769, %v784
          %v793 = vcombine.high %v769, %v784
          %v795 = vunpack.c.l.s4 1934713408
          %v796 = vunpack.c.0.s8 %v795
          %v797 = vlaneseq
          %v798 = vshrl.u32 %v797, 7
          %v799 = vsub.s32 %v796, %v798
          %v800 = vrot.slane %v792, %v799
          %v802 = vunpack.c.l.s4 1934713408
          %v803 = vunpack.c.0.s8 %v802
          %v804 = vlaneseq
          %v805 = vshrl.u32 %v804, 7
          %v806 = vsub.s32 %v803, %v805
          %v807 = vrot.slane %v793, %v806
          %v808 = vcombine.low %v776, %v791
          %v809 = vcombine.high %v776, %v791
          %v811 = vunpack.c.l.s4 1934713408
          %v812 = vunpack.c.0.s8 %v811
          %v813 = vlaneseq
          %v814 = vshrl.u32 %v813, 7
          %v815 = vsub.s32 %v812, %v814
          %v816 = vrot.slane %v808, %v815
          %v818 = vunpack.c.l.s4 1934713408
          %v819 = vunpack.c.0.s8 %v818
          %v820 = vlaneseq
          %v821 = vshrl.u32 %v820, 7
          %v822 = vsub.s32 %v819, %v821
          %v823 = vrot.slane %v809, %v822
          %v824 = vcombine.high %v800, 0.0
          %v825 = vcombine.high %v807, 0.0
          %v826 = vcombine.high %v816, 0.0
          %v827 = vcombine.high %v823, 0.0
          %v828 = vcombine.low %v800, %v807
          %v830 = vunpack.c.l.s4 1983009808
          %v831 = vunpack.c.0.s8 %v830
          %v832 = vlaneseq
          %v833 = vshrl.u32 %v832, 7
          %v834 = vsub.s32 %v831, %v833
          %v835 = vrot.slane %v828, %v834
          %v836 = vcombine.low %v824, %v825
          %v838 = vunpack.c.l.s4 1983009808
          %v839 = vunpack.c.0.s8 %v838
          %v840 = vlaneseq
          %v841 = vshrl.u32 %v840, 7
          %v842 = vsub.s32 %v839, %v841
          %v843 = vrot.slane %v836, %v842
          %v844 = vcombine.low %v816, %v823
          %v846 = vunpack.c.l.s4 1983009808
          %v847 = vunpack.c.0.s8 %v846
          %v848 = vlaneseq
          %v849 = vshrl.u32 %v848, 7
          %v850 = vsub.s32 %v847, %v849
          %v851 = vrot.slane %v844, %v850
          %v852 = vcombine.low %v826, %v827
          %v854 = vunpack.c.l.s4 1983009808
          %v855 = vunpack.c.0.s8 %v854
          %v856 = vlaneseq
          %v857 = vshrl.u32 %v856, 7
          %v858 = vsub.s32 %v855, %v857
          %v859 = vrot.slane %v852, %v858
          %v860 = vcombine.low %v835, %v843
          %v862 = vunpack.c.l.s4 1934713408
          %v863 = vunpack.c.0.s8 %v862
          %v864 = vlaneseq
          %v865 = vshrl.u32 %v864, 7
          %v866 = vsub.s32 %v863, %v865
          %v867 = vrot.slane %v860, %v866
          %v868 = vcombine.low %v851, %v859
          %v870 = vunpack.c.l.s4 1934713408
          %v871 = vunpack.c.0.s8 %v870
          %v872 = vlaneseq
          %v873 = vshrl.u32 %v872, 7
          %v874 = vsub.s32 %v871, %v873
          %v875 = vrot.slane %v868, %v874
          %v876 = vcombine.low %v867, %v875
          %v877 = vcombine.high %v867, %v875
          %v878 = vpack.c.bf16 %v876, %v876
          %v879 = vpack.c.bf16 %v877, %v877
          %881 = vrot.lane.b32.xlu0 %v753, 120
          %v882 = vpop.permute.xlu0 %881
          %v884 = vcombine.high %v753, 0.0
          %v886 = vunpack.c.l.s4 1983009808
          %v887 = vunpack.c.0.s8 %v886
          %v888 = vlaneseq
          %v889 = vshrl.u32 %v888, 7
          %v890 = vsub.s32 %v887, %v889
          %v891 = vrot.slane %v753, %v890
          %v893 = vunpack.c.l.s4 1983009808
          %v894 = vunpack.c.0.s8 %v893
          %v895 = vlaneseq
          %v896 = vshrl.u32 %v895, 7
          %v897 = vsub.s32 %v894, %v896
          %v898 = vrot.slane %v884, %v897
          %v899 = vcombine.high %v882, 0.0
          %v901 = vunpack.c.l.s4 1983009808
          %v902 = vunpack.c.0.s8 %v901
          %v903 = vlaneseq
          %v904 = vshrl.u32 %v903, 7
          %v905 = vsub.s32 %v902, %v904
          %v906 = vrot.slane %v882, %v905
          %v908 = vunpack.c.l.s4 1983009808
          %v909 = vunpack.c.0.s8 %v908
          %v910 = vlaneseq
          %v911 = vshrl.u32 %v910, 7
          %v912 = vsub.s32 %v909, %v911
          %v913 = vrot.slane %v899, %v912
          %v914 = vcombine.low %v891, %v906
          %v915 = vcombine.high %v891, %v906
          %v917 = vunpack.c.l.s4 1934713408
          %v918 = vunpack.c.0.s8 %v917
          %v919 = vlaneseq
          %v920 = vshrl.u32 %v919, 7
          %v921 = vsub.s32 %v918, %v920
          %v922 = vrot.slane %v914, %v921
          %v924 = vunpack.c.l.s4 1934713408
          %v925 = vunpack.c.0.s8 %v924
          %v926 = vlaneseq
          %v927 = vshrl.u32 %v926, 7
          %v928 = vsub.s32 %v925, %v927
          %v929 = vrot.slane %v915, %v928
          %v930 = vcombine.low %v898, %v913
          %v931 = vcombine.high %v898, %v913
          %v933 = vunpack.c.l.s4 1934713408
          %v934 = vunpack.c.0.s8 %v933
          %v935 = vlaneseq
          %v936 = vshrl.u32 %v935, 7
          %v937 = vsub.s32 %v934, %v936
          %v938 = vrot.slane %v930, %v937
          %v940 = vunpack.c.l.s4 1934713408
          %v941 = vunpack.c.0.s8 %v940
          %v942 = vlaneseq
          %v943 = vshrl.u32 %v942, 7
          %v944 = vsub.s32 %v941, %v943
          %v945 = vrot.slane %v931, %v944
          %v946 = vcombine.high %v922, 0.0
          %v947 = vcombine.high %v929, 0.0
          %v948 = vcombine.high %v938, 0.0
          %v949 = vcombine.high %v945, 0.0
          %v950 = vcombine.low %v922, %v929
          %v952 = vunpack.c.l.s4 1983009808
          %v953 = vunpack.c.0.s8 %v952
          %v954 = vlaneseq
          %v955 = vshrl.u32 %v954, 7
          %v956 = vsub.s32 %v953, %v955
          %v957 = vrot.slane %v950, %v956
          %v958 = vcombine.low %v946, %v947
          %v960 = vunpack.c.l.s4 1983009808
          %v961 = vunpack.c.0.s8 %v960
          %v962 = vlaneseq
          %v963 = vshrl.u32 %v962, 7
          %v964 = vsub.s32 %v961, %v963
          %v965 = vrot.slane %v958, %v964
          %v966 = vcombine.low %v938, %v945
          %v968 = vunpack.c.l.s4 1983009808
          %v969 = vunpack.c.0.s8 %v968
          %v970 = vlaneseq
          %v971 = vshrl.u32 %v970, 7
          %v972 = vsub.s32 %v969, %v971
          %v973 = vrot.slane %v966, %v972
          %v974 = vcombine.low %v948, %v949
          %v976 = vunpack.c.l.s4 1983009808
          %v977 = vunpack.c.0.s8 %v976
          %v978 = vlaneseq
          %v979 = vshrl.u32 %v978, 7
          %v980 = vsub.s32 %v977, %v979
          %v981 = vrot.slane %v974, %v980
          %v982 = vcombine.low %v957, %v965
          %v984 = vunpack.c.l.s4 1934713408
          %v985 = vunpack.c.0.s8 %v984
          %v986 = vlaneseq
          %v987 = vshrl.u32 %v986, 7
          %v988 = vsub.s32 %v985, %v987
          %v989 = vrot.slane %v982, %v988
          %v990 = vcombine.low %v973, %v981
          %v992 = vunpack.c.l.s4 1934713408
          %v993 = vunpack.c.0.s8 %v992
          %v994 = vlaneseq
          %v995 = vshrl.u32 %v994, 7
          %v996 = vsub.s32 %v993, %v995
          %v997 = vrot.slane %v990, %v996
          %v998 = vcombine.low %v989, %v997
          %v999 = vcombine.high %v989, %v997
          %v1000 = vpack.c.bf16 %v998, %v998
          %v1001 = vpack.c.bf16 %v999, %v999
          %1002 = vrot.lane.b32.xlu0 %v753, 112
          %v1003 = vpop.permute.xlu0 %1002
          %1004 = vrot.lane.b32.xlu0 %v882, 112
          %v1005 = vpop.permute.xlu0 %1004
          %v1008 = vcombine.high %v1003, 0.0
          %v1010 = vunpack.c.l.s4 1983009808
          %v1011 = vunpack.c.0.s8 %v1010
          %v1012 = vlaneseq
          %v1013 = vshrl.u32 %v1012, 7
          %v1014 = vsub.s32 %v1011, %v1013
          %v1015 = vrot.slane %v1003, %v1014
          %v1017 = vunpack.c.l.s4 1983009808
          %v1018 = vunpack.c.0.s8 %v1017
          %v1019 = vlaneseq
          %v1020 = vshrl.u32 %v1019, 7
          %v1021 = vsub.s32 %v1018, %v1020
          %v1022 = vrot.slane %v1008, %v1021
          %v1023 = vcombine.high %v1005, 0.0
          %v1025 = vunpack.c.l.s4 1983009808
          %v1026 = vunpack.c.0.s8 %v1025
          %v1027 = vlaneseq
          %v1028 = vshrl.u32 %v1027, 7
          %v1029 = vsub.s32 %v1026, %v1028
          %v1030 = vrot.slane %v1005, %v1029
          %v1032 = vunpack.c.l.s4 1983009808
          %v1033 = vunpack.c.0.s8 %v1032
          %v1034 = vlaneseq
          %v1035 = vshrl.u32 %v1034, 7
          %v1036 = vsub.s32 %v1033, %v1035
          %v1037 = vrot.slane %v1023, %v1036
          %v1038 = vcombine.low %v1015, %v1030
          %v1039 = vcombine.high %v1015, %v1030
          %v1041 = vunpack.c.l.s4 1934713408
          %v1042 = vunpack.c.0.s8 %v1041
          %v1043 = vlaneseq
          %v1044 = vshrl.u32 %v1043, 7
          %v1045 = vsub.s32 %v1042, %v1044
          %v1046 = vrot.slane %v1038, %v1045
          %v1048 = vunpack.c.l.s4 1934713408
          %v1049 = vunpack.c.0.s8 %v1048
          %v1050 = vlaneseq
          %v1051 = vshrl.u32 %v1050, 7
          %v1052 = vsub.s32 %v1049, %v1051
          %v1053 = vrot.slane %v1039, %v1052
          %v1054 = vcombine.low %v1022, %v1037
          %v1055 = vcombine.high %v1022, %v1037
          %v1057 = vunpack.c.l.s4 1934713408
          %v1058 = vunpack.c.0.s8 %v1057
          %v1059 = vlaneseq
          %v1060 = vshrl.u32 %v1059, 7
          %v1061 = vsub.s32 %v1058, %v1060
          %v1062 = vrot.slane %v1054, %v1061
          %v1064 = vunpack.c.l.s4 1934713408
          %v1065 = vunpack.c.0.s8 %v1064
          %v1066 = vlaneseq
          %v1067 = vshrl.u32 %v1066, 7
          %v1068 = vsub.s32 %v1065, %v1067
          %v1069 = vrot.slane %v1055, %v1068
          %v1070 = vcombine.high %v1046, 0.0
          %v1071 = vcombine.high %v1053, 0.0
          %v1072 = vcombine.high %v1062, 0.0
          %v1073 = vcombine.high %v1069, 0.0
          %v1074 = vcombine.low %v1046, %v1053
          %v1076 = vunpack.c.l.s4 1983009808
          %v1077 = vunpack.c.0.s8 %v1076
          %v1078 = vlaneseq
          %v1079 = vshrl.u32 %v1078, 7
          %v1080 = vsub.s32 %v1077, %v1079
          %v1081 = vrot.slane %v1074, %v1080
          %v1082 = vcombine.low %v1070, %v1071
          %v1084 = vunpack.c.l.s4 1983009808
          %v1085 = vunpack.c.0.s8 %v1084
          %v1086 = vlaneseq
          %v1087 = vshrl.u32 %v1086, 7
          %v1088 = vsub.s32 %v1085, %v1087
          %v1089 = vrot.slane %v1082, %v1088
          %v1090 = vcombine.low %v1062, %v1069
          %v1092 = vunpack.c.l.s4 1983009808
          %v1093 = vunpack.c.0.s8 %v1092
          %v1094 = vlaneseq
          %v1095 = vshrl.u32 %v1094, 7
          %v1096 = vsub.s32 %v1093, %v1095
          %v1097 = vrot.slane %v1090, %v1096
          %v1098 = vcombine.low %v1072, %v1073
          %v1100 = vunpack.c.l.s4 1983009808
          %v1101 = vunpack.c.0.s8 %v1100
          %v1102 = vlaneseq
          %v1103 = vshrl.u32 %v1102, 7
          %v1104 = vsub.s32 %v1101, %v1103
          %v1105 = vrot.slane %v1098, %v1104
          %v1106 = vcombine.low %v1081, %v1089
          %v1108 = vunpack.c.l.s4 1934713408
          %v1109 = vunpack.c.0.s8 %v1108
          %v1110 = vlaneseq
          %v1111 = vshrl.u32 %v1110, 7
          %v1112 = vsub.s32 %v1109, %v1111
          %v1113 = vrot.slane %v1106, %v1112
          %v1114 = vcombine.low %v1097, %v1105
          %v1116 = vunpack.c.l.s4 1934713408
          %v1117 = vunpack.c.0.s8 %v1116
          %v1118 = vlaneseq
          %v1119 = vshrl.u32 %v1118, 7
          %v1120 = vsub.s32 %v1117, %v1119
          %v1121 = vrot.slane %v1114, %v1120
          %v1122 = vcombine.low %v1113, %v1121
          %v1123 = vcombine.high %v1113, %v1121
          %v1124 = vpack.c.bf16 %v1122, %v1122
          %v1125 = vpack.c.bf16 %v1123, %v1123
          %vm1126 = vcmask 64512
          %v1128 = vsel %vm1126, %v878, 0
          %v1131 = vsel %vm1126, %v1000, 0
          %1133 = vmatprep.subr.bf16.mxu0 0
          %1134 = vmatpush1.bf16.xpose.msra.mxu0 0
          %1135 = vmatprep.subr.bf16.mxu0 0
          %1136 = vmatpush1.bf16.xpose.msra.mxu0 0
          %1137 = vmatprep.subr.bf16.mxu0 0
          %1138 = vmatpush1.bf16.xpose.msra.mxu0 0
          %1139 = vmatprep.subr.bf16.mxu0 0
          %1140 = vmatpush1.bf16.xpose.msra.mxu0 0
          %1141 = vmatprep.subr.bf16.mxu0 0
          %1142 = vmatpush1.bf16.xpose.msra.mxu0 0
          %1143 = vmatprep.subr.bf16.mxu0 0
          %1144 = vmatpush1.bf16.xpose.msra.mxu0 0
          %1145 = vmatprep.subr.bf16.mxu0 0
          %1146 = vmatpush1.bf16.xpose.msra.mxu0 0
          %1147 = vmatprep.subr.bf16.mxu0 0
          %1148 = vmatpush1.bf16.xpose.msra.mxu0 %v1131
          %1149 = vmatprep.subr.bf16.mxu0 0
          %1150 = vmatpush2.bf16.xpose.msra.mxu0 0
          %1151 = vmatprep.subr.bf16.mxu0 0
          %1152 = vmatpush2.bf16.xpose.msra.mxu0 0
          %1153 = vmatprep.subr.bf16.mxu0 0
          %1154 = vmatpush2.bf16.xpose.msra.mxu0 0
          %1155 = vmatprep.subr.bf16.mxu0 0
          %1156 = vmatpush2.bf16.xpose.msra.mxu0 0
          %1157 = vmatprep.subr.bf16.mxu0 0
          %1158 = vmatpush2.bf16.xpose.msra.mxu0 0
          %1159 = vmatprep.subr.bf16.mxu0 0
          %1160 = vmatpush2.bf16.xpose.msra.mxu0 0
          %1161 = vmatprep.subr.bf16.mxu0 0
          %1162 = vmatpush2.bf16.xpose.msra.mxu0 0
          %1163 = vmatprep.subr.bf16.mxu0 0
          %1164 = vmatpush2.bf16.xpose.msra.mxu0 0
          %1165 = vmatprep.mubr.bf16.mxu0 0
          %1166 = vmatmul.mubr.bf16.gmra.mxu0 %v1128
          %v1167 = vpop.f32.mrf.mxu0
          %v1168 = vadd.f32 %v611, %v1167
          %v1169 = vpop.f32.mrf.mxu0
          %v1170 = vpop.f32.mrf.mxu0
          %v1171 = vpop.f32.mrf.mxu0
          %1172 = vdwg.mxu0
          %v1174 = vsel %vm1126, %v879, 0
          %v1177 = vsel %vm1126, %v1001, 0
          %1179 = vmatprep.subr.bf16.mxu0 0
          %1180 = vmatpush1.bf16.xpose.msra.mxu0 0
          %1181 = vmatprep.subr.bf16.mxu0 0
          %1182 = vmatpush1.bf16.xpose.msra.mxu0 0
          %1183 = vmatprep.subr.bf16.mxu0 0
          %1184 = vmatpush1.bf16.xpose.msra.mxu0 0
          %1185 = vmatprep.subr.bf16.mxu0 0
          %1186 = vmatpush1.bf16.xpose.msra.mxu0 0
          %1187 = vmatprep.subr.bf16.mxu0 0
          %1188 = vmatpush1.bf16.xpose.msra.mxu0 0
          %1189 = vmatprep.subr.bf16.mxu0 0
          %1190 = vmatpush1.bf16.xpose.msra.mxu0 0
          %1191 = vmatprep.subr.bf16.mxu0 0
          %1192 = vmatpush1.bf16.xpose.msra.mxu0 0
          %1193 = vmatprep.subr.bf16.mxu0 0
          %1194 = vmatpush1.bf16.xpose.msra.mxu0 %v1177
          %1195 = vmatprep.subr.bf16.mxu0 0
          %1196 = vmatpush2.bf16.xpose.msra.mxu0 0
          %1197 = vmatprep.subr.bf16.mxu0 0
          %1198 = vmatpush2.bf16.xpose.msra.mxu0 0
          %1199 = vmatprep.subr.bf16.mxu0 0
          %1200 = vmatpush2.bf16.xpose.msra.mxu0 0
          %1201 = vmatprep.subr.bf16.mxu0 0
          %1202 = vmatpush2.bf16.xpose.msra.mxu0 0
          %1203 = vmatprep.subr.bf16.mxu0 0
          %1204 = vmatpush2.bf16.xpose.msra.mxu0 0
          %1205 = vmatprep.subr.bf16.mxu0 0
          %1206 = vmatpush2.bf16.xpose.msra.mxu0 0
          %1207 = vmatprep.subr.bf16.mxu0 0
          %1208 = vmatpush2.bf16.xpose.msra.mxu0 0
          %1209 = vmatprep.subr.bf16.mxu0 0
          %1210 = vmatpush2.bf16.xpose.msra.mxu0 0
          %1211 = vmatprep.mubr.bf16.mxu0 0
          %1212 = vmatmul.mubr.bf16.gmra.mxu0 %v1174
          %v1213 = vpop.f32.mrf.mxu0
          %v1214 = vadd.f32 %v611, %v1213
          %v1215 = vpop.f32.mrf.mxu0
          %v1216 = vpop.f32.mrf.mxu0
          %v1217 = vpop.f32.mrf.mxu0
          %1218 = vdwg.mxu0
          %v1219 = vsel %vm1126, %v1168, -inf
          %1220 = vmax.xlane.f32.xlu0 %v1219
          %v1221 = vpop.xlane.xlu0 %1220
          %v1222 = vsel %vm1126, %v1214, -inf
          %1223 = vmax.xlane.f32.xlu0 %v1222
          %v1224 = vpop.xlane.xlu0 %1223
          %v1225 = vsub.f32 %v1168, %v1221
          %v1226 = vsub.f32 %v1214, %v1224
          %v1227 = vmul.f32 %v1225, 1.442695
          %v1228 = vpow.pop %v1227
          %v1229 = vmul.f32 %v1226, 1.442695
          %v1230 = vpow.pop %v1229
          %v1231 = vsel %vm1126, %v1228, 0.0
          %1232 = vadd.xlane.f32.xlu0 %v1231
          %v1233 = vpop.xlane.xlu0 %1232
          %v1234 = vsel %vm1126, %v1230, 0.0
          %1235 = vadd.xlane.f32.xlu0 %v1234
          %v1236 = vpop.xlane.xlu0 %1235
          %v1237 = vrcp.pop %v1233
          %v1238 = vrcp.pop %v1236
          %v1239 = vmul.f32 %v1228, %v1237
          %v1240 = vmul.f32 %v1230, %v1238
          %1242 = vset.pattern.permute.xlu0 0
          %1243 = vperm.xlu0 %1242, %v614
          %v1244 = vpop.permute.xlu0 %1243
          %v1246 = vmul.f32 %v1239, %v1244
          %v1247 = vmul.f32 %v1240, %v1244
          %v1248 = vpack.c.bf16 %v1246, %v1246
          %v1249 = vpack.c.bf16 %v1247, %v1247
          %v1251 = vsel %vm1126, %v1248, 0
          %vm1253 = vcmask 1043456
          %v1255 = vsel %vm1253, %v1124, 0
          %1257 = vmatprep.subr.bf16.mxu0 0
          %1258 = vmatpush1.bf16.msra.mxu0 0
          %1259 = vmatprep.subr.bf16.mxu0 0
          %1260 = vmatpush1.bf16.msra.mxu0 0
          %1261 = vmatprep.subr.bf16.mxu0 0
          %1262 = vmatpush1.bf16.msra.mxu0 0
          %1263 = vmatprep.subr.bf16.mxu0 0
          %1264 = vmatpush1.bf16.msra.mxu0 0
          %1265 = vmatprep.subr.bf16.mxu0 0
          %1266 = vmatpush1.bf16.msra.mxu0 0
          %1267 = vmatprep.subr.bf16.mxu0 0
          %1268 = vmatpush1.bf16.msra.mxu0 0
          %1269 = vmatprep.subr.bf16.mxu0 0
          %1270 = vmatpush1.bf16.msra.mxu0 0
          %1271 = vmatprep.subr.bf16.mxu0 0
          %1272 = vmatpush1.bf16.msra.mxu0 %v1255
          %1273 = vmatprep.subr.bf16.mxu0 0
          %1274 = vmatpush2.bf16.msra.mxu0 0
          %1275 = vmatprep.subr.bf16.mxu0 0
          %1276 = vmatpush2.bf16.msra.mxu0 0
          %1277 = vmatprep.subr.bf16.mxu0 0
          %1278 = vmatpush2.bf16.msra.mxu0 0
          %1279 = vmatprep.subr.bf16.mxu0 0
          %1280 = vmatpush2.bf16.msra.mxu0 0
          %1281 = vmatprep.subr.bf16.mxu0 0
          %1282 = vmatpush2.bf16.msra.mxu0 0
          %1283 = vmatprep.subr.bf16.mxu0 0
          %1284 = vmatpush2.bf16.msra.mxu0 0
          %1285 = vmatprep.subr.bf16.mxu0 0
          %1286 = vmatpush2.bf16.msra.mxu0 0
          %1287 = vmatprep.subr.bf16.mxu0 0
          %1288 = vmatpush2.bf16.msra.mxu0 0
          %1289 = vmatprep.mubr.bf16.mxu0 0
          %1290 = vmatmul.mubr.bf16.gmra.mxu0 %v1251
          %v1291 = vpop.f32.mrf.mxu0
          %v1292 = vadd.f32 0.0, %v1291
          %v1293 = vpop.f32.mrf.mxu0
          %v1294 = vpop.f32.mrf.mxu0
          %v1295 = vpop.f32.mrf.mxu0
          %1296 = vdwg.mxu0
          %v1298 = vsel %vm1126, %v1249, 0
          %v1301 = vsel %vm1253, %v1125, 0
          %1303 = vmatprep.subr.bf16.mxu0 0
          %1304 = vmatpush1.bf16.msra.mxu0 0
          %1305 = vmatprep.subr.bf16.mxu0 0
          %1306 = vmatpush1.bf16.msra.mxu0 0
          %1307 = vmatprep.subr.bf16.mxu0 0
          %1308 = vmatpush1.bf16.msra.mxu0 0
          %1309 = vmatprep.subr.bf16.mxu0 0
          %1310 = vmatpush1.bf16.msra.mxu0 0
          %1311 = vmatprep.subr.bf16.mxu0 0
          %1312 = vmatpush1.bf16.msra.mxu0 0
          %1313 = vmatprep.subr.bf16.mxu0 0
          %1314 = vmatpush1.bf16.msra.mxu0 0
          %1315 = vmatprep.subr.bf16.mxu0 0
          %1316 = vmatpush1.bf16.msra.mxu0 0
          %1317 = vmatprep.subr.bf16.mxu0 0
          %1318 = vmatpush1.bf16.msra.mxu0 %v1301
          %1319 = vmatprep.subr.bf16.mxu0 0
          %1320 = vmatpush2.bf16.msra.mxu0 0
          %1321 = vmatprep.subr.bf16.mxu0 0
          %1322 = vmatpush2.bf16.msra.mxu0 0
          %1323 = vmatprep.subr.bf16.mxu0 0
          %1324 = vmatpush2.bf16.msra.mxu0 0
          %1325 = vmatprep.subr.bf16.mxu0 0
          %1326 = vmatpush2.bf16.msra.mxu0 0
          %1327 = vmatprep.subr.bf16.mxu0 0
          %1328 = vmatpush2.bf16.msra.mxu0 0
          %1329 = vmatprep.subr.bf16.mxu0 0
          %1330 = vmatpush2.bf16.msra.mxu0 0
          %1331 = vmatprep.subr.bf16.mxu0 0
          %1332 = vmatpush2.bf16.msra.mxu0 0
          %1333 = vmatprep.subr.bf16.mxu0 0
          %1334 = vmatpush2.bf16.msra.mxu0 0
          %1335 = vmatprep.mubr.bf16.mxu0 0
          %1336 = vmatmul.mubr.bf16.gmra.mxu0 %v1298
          %v1337 = vpop.f32.mrf.mxu0
          %v1338 = vadd.f32 0.0, %v1337
          %v1339 = vpop.f32.mrf.mxu0
          %v1340 = vpop.f32.mrf.mxu0
          %v1341 = vpop.f32.mrf.mxu0
          %1342 = vdwg.mxu0
          %v1343 = vcombine.high %v1292, 0.0
          %v1345 = vunpack.c.l.s4 1983009808
          %v1346 = vunpack.c.0.s8 %v1345
          %v1347 = vlaneseq
          %v1348 = vshrl.u32 %v1347, 7
          %v1349 = vsub.s32 %v1346, %v1348
          %v1350 = vrot.slane %v1292, %v1349
          %v1352 = vunpack.c.l.s4 1983009808
          %v1353 = vunpack.c.0.s8 %v1352
          %v1354 = vlaneseq
          %v1355 = vshrl.u32 %v1354, 7
          %v1356 = vsub.s32 %v1353, %v1355
          %v1357 = vrot.slane %v1343, %v1356
          %v1358 = vcombine.high %v1338, 0.0
          %v1360 = vunpack.c.l.s4 1983009808
          %v1361 = vunpack.c.0.s8 %v1360
          %v1362 = vlaneseq
          %v1363 = vshrl.u32 %v1362, 7
          %v1364 = vsub.s32 %v1361, %v1363
          %v1365 = vrot.slane %v1338, %v1364
          %v1367 = vunpack.c.l.s4 1983009808
          %v1368 = vunpack.c.0.s8 %v1367
          %v1369 = vlaneseq
          %v1370 = vshrl.u32 %v1369, 7
          %v1371 = vsub.s32 %v1368, %v1370
          %v1372 = vrot.slane %v1358, %v1371
          %v1373 = vcombine.low %v1350, %v1365
          %v1374 = vcombine.high %v1350, %v1365
          %v1376 = vunpack.c.l.s4 1934713408
          %v1377 = vunpack.c.0.s8 %v1376
          %v1378 = vlaneseq
          %v1379 = vshrl.u32 %v1378, 7
          %v1380 = vsub.s32 %v1377, %v1379
          %v1381 = vrot.slane %v1373, %v1380
          %v1383 = vunpack.c.l.s4 1934713408
          %v1384 = vunpack.c.0.s8 %v1383
          %v1385 = vlaneseq
          %v1386 = vshrl.u32 %v1385, 7
          %v1387 = vsub.s32 %v1384, %v1386
          %v1388 = vrot.slane %v1374, %v1387
          %v1389 = vcombine.low %v1357, %v1372
          %v1390 = vcombine.high %v1357, %v1372
          %v1392 = vunpack.c.l.s4 1934713408
          %v1393 = vunpack.c.0.s8 %v1392
          %v1394 = vlaneseq
          %v1395 = vshrl.u32 %v1394, 7
          %v1396 = vsub.s32 %v1393, %v1395
          %v1397 = vrot.slane %v1389, %v1396
          %v1399 = vunpack.c.l.s4 1934713408
          %v1400 = vunpack.c.0.s8 %v1399
          %v1401 = vlaneseq
          %v1402 = vshrl.u32 %v1401, 7
          %v1403 = vsub.s32 %v1400, %v1402
          %v1404 = vrot.slane %v1390, %v1403
          %v1405 = vcombine.high %v1381, 0.0
          %v1406 = vcombine.high %v1388, 0.0
          %v1407 = vcombine.high %v1397, 0.0
          %v1408 = vcombine.high %v1404, 0.0
          %v1409 = vcombine.low %v1381, %v1388
          %v1411 = vunpack.c.l.s4 1983009808
          %v1412 = vunpack.c.0.s8 %v1411
          %v1413 = vlaneseq
          %v1414 = vshrl.u32 %v1413, 7
          %v1415 = vsub.s32 %v1412, %v1414
          %v1416 = vrot.slane %v1409, %v1415
          %v1417 = vcombine.low %v1405, %v1406
          %v1419 = vunpack.c.l.s4 1983009808
          %v1420 = vunpack.c.0.s8 %v1419
          %v1421 = vlaneseq
          %v1422 = vshrl.u32 %v1421, 7
          %v1423 = vsub.s32 %v1420, %v1422
          %v1424 = vrot.slane %v1417, %v1423
          %v1425 = vcombine.low %v1397, %v1404
          %v1427 = vunpack.c.l.s4 1983009808
          %v1428 = vunpack.c.0.s8 %v1427
          %v1429 = vlaneseq
          %v1430 = vshrl.u32 %v1429, 7
          %v1431 = vsub.s32 %v1428, %v1430
          %v1432 = vrot.slane %v1425, %v1431
          %v1433 = vcombine.low %v1407, %v1408
          %v1435 = vunpack.c.l.s4 1983009808
          %v1436 = vunpack.c.0.s8 %v1435
          %v1437 = vlaneseq
          %v1438 = vshrl.u32 %v1437, 7
          %v1439 = vsub.s32 %v1436, %v1438
          %v1440 = vrot.slane %v1433, %v1439
          %v1441 = vcombine.low %v1416, %v1424
          %v1443 = vunpack.c.l.s4 1934713408
          %v1444 = vunpack.c.0.s8 %v1443
          %v1445 = vlaneseq
          %v1446 = vshrl.u32 %v1445, 7
          %v1447 = vsub.s32 %v1444, %v1446
          %v1448 = vrot.slane %v1441, %v1447
          %v1449 = vcombine.low %v1432, %v1440
          %v1451 = vunpack.c.l.s4 1934713408
          %v1452 = vunpack.c.0.s8 %v1451
          %v1453 = vlaneseq
          %v1454 = vshrl.u32 %v1453, 7
          %v1455 = vsub.s32 %v1452, %v1454
          %v1456 = vrot.slane %v1449, %v1455
          %v1457 = vcombine.low %v1448, %v1456
          %v1458 = vcombine.high %v1448, %v1456
          %1460 = vrot.lane.b32.xlu0 %v1458, 8
          %v1461 = vpop.permute.xlu0 %1460
          %v1463 = vsel %vm1126, %v1457, %v1461
          %v1464 = vpack.c.bf16 %v1463, %v1463
          %v1465 = vld [vmem:[%s8] sm:$0xf]
          %v1466 = vld [vmem:[%s8 + $0x4] sm:$0xf]
          %v1469 = vunpack.c.l.b16 %v1465
          %v1470 = vunpack.c.l.b16 %v1466
          %v1471 = vpack.c.b16 %v1470, %v1469
          %v1474 = vsel %vm714, %v1464, 0
          %1476 = vmatprep.subr.bf16.mxu0 0
          %1477 = vmatpush1.bf16.msra.mxu0 0
          %1478 = vmatprep.subr.bf16.mxu0 0
          %1479 = vmatpush1.bf16.msra.mxu0 0
          %1480 = vmatprep.subr.bf16.mxu0 0
          %1481 = vmatpush1.bf16.msra.mxu0 0
          %1482 = vmatprep.subr.bf16.mxu0 0
          %1483 = vmatpush1.bf16.msra.mxu0 0
          %1484 = vmatprep.subr.bf16.mxu0 0
          %1485 = vmatpush1.bf16.msra.mxu0 0
          %1486 = vmatprep.subr.bf16.mxu0 0
          %1487 = vmatpush1.bf16.msra.mxu0 0
          %1488 = vmatprep.subr.bf16.mxu0 0
          %1489 = vmatpush1.bf16.msra.mxu0 0
          %1490 = vmatprep.subr.bf16.mxu0 0
          %1491 = vmatpush1.bf16.msra.mxu0 %v1471
          %1492 = vmatprep.subr.bf16.mxu0 0
          %1493 = vmatpush2.bf16.msra.mxu0 0
          %1494 = vmatprep.subr.bf16.mxu0 0
          %1495 = vmatpush2.bf16.msra.mxu0 0
          %1496 = vmatprep.subr.bf16.mxu0 0
          %1497 = vmatpush2.bf16.msra.mxu0 0
          %1498 = vmatprep.subr.bf16.mxu0 0
          %1499 = vmatpush2.bf16.msra.mxu0 0
          %1500 = vmatprep.subr.bf16.mxu0 0
          %1501 = vmatpush2.bf16.msra.mxu0 0
          %1502 = vmatprep.subr.bf16.mxu0 0
          %1503 = vmatpush2.bf16.msra.mxu0 0
          %1504 = vmatprep.subr.bf16.mxu0 0
          %1505 = vmatpush2.bf16.msra.mxu0 0
          %1506 = vmatprep.subr.bf16.mxu0 0
          %1507 = vmatpush2.bf16.msra.mxu0 0
          %1508 = vmatprep.mubr.bf16.mxu0 0
          %1509 = vmatmul.mubr.bf16.gmra.mxu0 %v1474
          %v1510 = vpop.f32.mrf.mxu0
          %v1511 = vadd.f32 0.0, %v1510
          %v1512 = vpop.f32.mrf.mxu0
          %v1513 = vpop.f32.mrf.mxu0
          %v1514 = vpop.f32.mrf.mxu0
          %1515 = vdwg.mxu0
          %s1516 = sld [smem:[#allocation4]]
          %v1517 = vstv %s1516
          %v1518 = vmul.f32 %v1511, %v1517
          %v1519 = vadd.f32 %v1518, %v599
          %1520 = vst.msk [vmem:[#allocation2] sm:$0xff] %vm617, %v1519
          %v1521 = vld [vmem:[%s9] sm:$0x1]
          %v1522 = vld [vmem:[%s10] sm:$0x1]
          %v1523 = vsel %vm617, %v1519, 0.0
          %1524 = vadd.xlane.f32.xlu0 %v1523
          %v1525 = vpop.xlane.xlu0 %1524
          %v1526 = vmul.f32 %v1525, %v621
          %v1527 = vsub.f32 %v1519, %v1526
          %v1528 = vmul.f32 %v1527, %v1527
          %v1529 = vsel %vm617, %v1528, 0.0
          %1530 = vadd.xlane.f32.xlu0 %v1529
          %v1531 = vpop.xlane.xlu0 %1530
          %v1532 = vmul.f32 %v1531, %v621
          %v1533 = vadd.f32 %v1532, 1e-05
          %v1534 = vrsqrt.pop %v1533
          %v1535 = vmul.f32 %v1527, %v1534
          %v1537 = vlaneseq
          %v1538 = vshrl.u32 %v1537, 7
          %v1539 = vsub.s32 0, %v1538
          %v1540 = vrot.slane %v1521, %v1539
          %v1542 = vmul.f32 %v1535, %v1540
          %v1544 = vlaneseq
          %v1545 = vshrl.u32 %v1544, 7
          %v1546 = vsub.s32 0, %v1545
          %v1547 = vrot.slane %v1522, %v1546
          %v1549 = vadd.f32 %v1542, %v1547
          %v1550 = vpack.c.bf16 %v1549, %v1549
          %vm1551 = vcmask 257024
          %1552 = vst.msk [vmem:[#allocation3] sm:$0xf] %vm1551, %v1550
          %1553 = vst.msk [vmem:[%s564] sm:$0xff] %vm617, 0.0
        $region84: #{tpu_custom_call.1} parent=75 // pred_fallthru
          _
        %v1554 = vld [vmem:[#allocation3] sm:$0xf]
        %v1555 = vld [vmem:[%s586] sm:$0xf]
        %v1556 = vld [vmem:[%s586 + $0x4] sm:$0xf]
        %v1557 = vld [vmem:[%s586 + $0x8] sm:$0xf]
        %v1558 = vld [vmem:[%s586 + $0xc] sm:$0xf]
        %v1563 = vunpack.c.l.b16 %v1555
        %v1564 = vunpack.c.l.b16 %v1556
        %v1565 = vunpack.c.l.b16 %v1557
        %v1566 = vunpack.c.l.b16 %v1558
        %v1567 = vpack.c.b16 %v1564, %v1563
        %v1568 = vpack.c.b16 %v1566, %v1565
        %vm1571 = vcmask 261120
        %v1573 = vsel %vm1571, %v1554, 0
        %1575 = vmatprep.subr.bf16.mxu0 0
        %1576 = vmatpush1.bf16.msra.mxu0 0
        %1577 = vmatprep.subr.bf16.mxu0 0
        %1578 = vmatpush1.bf16.msra.mxu0 0
        %1579 = vmatprep.subr.bf16.mxu0 0
        %1580 = vmatpush1.bf16.msra.mxu0 0
        %1581 = vmatprep.subr.bf16.mxu0 0
        %1582 = vmatpush1.bf16.msra.mxu0 0
        %1583 = vmatprep.subr.bf16.mxu0 0
        %1584 = vmatpush1.bf16.msra.mxu0 0
        %1585 = vmatprep.subr.bf16.mxu0 0
        %1586 = vmatpush1.bf16.msra.mxu0 0
        %1587 = vmatprep.subr.bf16.mxu0 0
        %1588 = vmatpush1.bf16.msra.mxu0 %v1568
        %1589 = vmatprep.subr.bf16.mxu0 0
        %1590 = vmatpush1.bf16.msra.mxu0 %v1567
        %1591 = vmatprep.subr.bf16.mxu0 0
        %1592 = vmatpush2.bf16.msra.mxu0 0
        %1593 = vmatprep.subr.bf16.mxu0 0
        %1594 = vmatpush2.bf16.msra.mxu0 0
        %1595 = vmatprep.subr.bf16.mxu0 0
        %1596 = vmatpush2.bf16.msra.mxu0 0
        %1597 = vmatprep.subr.bf16.mxu0 0
        %1598 = vmatpush2.bf16.msra.mxu0 0
        %1599 = vmatprep.subr.bf16.mxu0 0
        %1600 = vmatpush2.bf16.msra.mxu0 0
        %1601 = vmatprep.subr.bf16.mxu0 0
        %1602 = vmatpush2.bf16.msra.mxu0 0
        %1603 = vmatprep.subr.bf16.mxu0 0
        %1604 = vmatpush2.bf16.msra.mxu0 0
        %1605 = vmatprep.subr.bf16.mxu0 0
        %1606 = vmatpush2.bf16.msra.mxu0 0
        %1607 = vmatprep.mubr.bf16.mxu0 0
        %1608 = vmatmul.mubr.bf16.gmra.mxu0 %v1573
        %v1609 = vpop.f32.mrf.mxu0
        %v1610 = vadd.f32 0.0, %v1609
        %v1611 = vpop.f32.mrf.mxu0
        %v1612 = vpop.f32.mrf.mxu0
        %v1613 = vpop.f32.mrf.mxu0
        %1614 = vdwg.mxu0
        %v1615 = vmul.f32 %v1610, %v1610
        %v1616 = vmul.f32 %v1610, %v1615
        %v1617 = vmul.f32 %v1616, 0.044715
        %v1618 = vadd.f32 %v1610, %v1617
        %v1619 = vmul.f32 %v1618, 0.7978846
        %v1620 = vtanh.pop %v1619
        %v1621 = vadd.f32 %v1620, 1.0
        %v1622 = vmul.f32 %v1621, 0.5
        %v1623 = vmul.f32 %v1610, %v1622
        %v1624 = vld [vmem:[%s564] sm:$0xff]
        %v1625 = vpack.c.bf16 %v1623, %v1623
        %v1626 = vld [vmem:[%s591] sm:$0xf]
        %v1627 = vld [vmem:[%s591 + $0x4] sm:$0xf]
        %v1628 = vld [vmem:[%s591 + $0x8] sm:$0xf]
        %v1629 = vld [vmem:[%s591 + $0xc] sm:$0xf]
        %v1630 = vld [vmem:[%s591 + $0x10] sm:$0xf]
        %v1631 = vld [vmem:[%s591 + $0x14] sm:$0xf]
        %v1632 = vld [vmem:[%s591 + $0x18] sm:$0xf]
        %v1633 = vld [vmem:[%s591 + $0x1c] sm:$0xf]
        %v1634 = vld [vmem:[%s591 + $0x20] sm:$0xf]
        %v1635 = vld [vmem:[%s591 + $0x24] sm:$0xf]
        %v1636 = vld [vmem:[%s591 + $0x28] sm:$0xf]
        %v1637 = vld [vmem:[%s591 + $0x2c] sm:$0xf]
        %v1638 = vld [vmem:[%s591 + $0x30] sm:$0xf]
        %v1639 = vld [vmem:[%s591 + $0x34] sm:$0xf]
        %v1640 = vld [vmem:[%s591 + $0x38] sm:$0xf]
        %v1641 = vld [vmem:[%s591 + $0x3c] sm:$0xf]
        %v1658 = vunpack.c.l.b16 %v1626
        %v1659 = vunpack.c.l.b16 %v1627
        %v1660 = vunpack.c.l.b16 %v1628
        %v1661 = vunpack.c.l.b16 %v1629
        %v1662 = vunpack.c.l.b16 %v1630
        %v1663 = vunpack.c.l.b16 %v1631
        %v1664 = vunpack.c.l.b16 %v1632
        %v1665 = vunpack.c.l.b16 %v1633
        %v1666 = vunpack.c.l.b16 %v1634
        %v1667 = vunpack.c.l.b16 %v1635
        %v1668 = vunpack.c.l.b16 %v1636
        %v1669 = vunpack.c.l.b16 %v1637
        %v1670 = vunpack.c.l.b16 %v1638
        %v1671 = vunpack.c.l.b16 %v1639
        %v1672 = vunpack.c.l.b16 %v1640
        %v1673 = vunpack.c.l.b16 %v1641
        %v1674 = vpack.c.b16 %v1659, %v1658
        %v1675 = vpack.c.b16 %v1661, %v1660
        %v1676 = vpack.c.b16 %v1663, %v1662
        %v1677 = vpack.c.b16 %v1665, %v1664
        %v1678 = vpack.c.b16 %v1667, %v1666
        %v1679 = vpack.c.b16 %v1669, %v1668
        %v1680 = vpack.c.b16 %v1671, %v1670
        %v1681 = vpack.c.b16 %v1673, %v1672
        %1690 = vmatprep.subr.bf16.mxu0 0
        %1691 = vmatpush1.bf16.msra.mxu0 %v1681
        %1692 = vmatprep.subr.bf16.mxu0 0
        %1693 = vmatpush1.bf16.msra.mxu0 %v1680
        %1694 = vmatprep.subr.bf16.mxu0 0
        %1695 = vmatpush1.bf16.msra.mxu0 %v1679
        %1696 = vmatprep.subr.bf16.mxu0 0
        %1697 = vmatpush1.bf16.msra.mxu0 %v1678
        %1698 = vmatprep.subr.bf16.mxu0 0
        %1699 = vmatpush1.bf16.msra.mxu0 %v1677
        %1700 = vmatprep.subr.bf16.mxu0 0
        %1701 = vmatpush1.bf16.msra.mxu0 %v1676
        %1702 = vmatprep.subr.bf16.mxu0 0
        %1703 = vmatpush1.bf16.msra.mxu0 %v1675
        %1704 = vmatprep.subr.bf16.mxu0 0
        %1705 = vmatpush1.bf16.msra.mxu0 %v1674
        %1706 = vmatprep.subr.bf16.mxu0 0
        %1707 = vmatpush2.bf16.msra.mxu0 0
        %1708 = vmatprep.subr.bf16.mxu0 0
        %1709 = vmatpush2.bf16.msra.mxu0 0
        %1710 = vmatprep.subr.bf16.mxu0 0
        %1711 = vmatpush2.bf16.msra.mxu0 0
        %1712 = vmatprep.subr.bf16.mxu0 0
        %1713 = vmatpush2.bf16.msra.mxu0 0
        %1714 = vmatprep.subr.bf16.mxu0 0
        %1715 = vmatpush2.bf16.msra.mxu0 0
        %1716 = vmatprep.subr.bf16.mxu0 0
        %1717 = vmatpush2.bf16.msra.mxu0 0
        %1718 = vmatprep.subr.bf16.mxu0 0
        %1719 = vmatpush2.bf16.msra.mxu0 0
        %1720 = vmatprep.subr.bf16.mxu0 0
        %1721 = vmatpush2.bf16.msra.mxu0 0
        %1722 = vmatprep.mubr.bf16.mxu0 0
        %1723 = vmatmul.mubr.bf16.gmra.mxu0 %v1625
        %v1724 = vpop.f32.mrf.mxu0
        %v1725 = vadd.f32 0.0, %v1724
        %v1726 = vpop.f32.mrf.mxu0
        %v1727 = vpop.f32.mrf.mxu0
        %v1728 = vpop.f32.mrf.mxu0
        %1729 = vdwg.mxu0
        %v1730 = vadd.f32 %v1624, %v1725
        %1731 = vst.msk [vmem:[%s564] sm:$0xff] %vm1571, %v1730
        // Predicated region
        $region85: #{tpu_custom_call.1} parent=75 // pred_check
          %p1732 = pneg %p594
        $region86: #{tpu_custom_call.1} parent=75 // pred_check_branch
          %1734 = sbr.rel (%p1732) target = $region88
        $region87: #{tpu_custom_call.1} parent=75 // pred_region
          %v1735 = vld [vmem:[%s564] sm:$0xff]
          %s1736 = sld [smem:[#allocation4 + $0x1]]
          %v1737 = vstv %s1736
          %v1738 = vmul.f32 %v1735, %v1737
          %v1739 = vld [vmem:[#allocation2] sm:$0xff]
          %v1740 = vadd.f32 %v1738, %v1739
          %1741 = vst.msk [vmem:[%s564] sm:$0xff] %vm1571, %v1740
        $region88: #{tpu_custom_call.1} parent=75 // pred_fallthru
          _
        %s1742 = sand.u32 %s381, 1
        %s1743 = scalar_lea.sflag [#allocation5], %s1742
        %s1744 = sand.u32 %s381, 1
        %s1745 = smul.addr %s1744, 8
        %s1746 = scalar_lea.vmem [#allocation7], %s1745
        // Predicated region
        $region89: #{tpu_custom_call.1} parent=75 // pred_check
          %p1747 = pneg %p391
        $region90: #{tpu_custom_call.1} parent=75 // pred_check_branch
          %1749 = sbr.rel (%p1747) target = $region92
        $region91: #{tpu_custom_call.1} parent=75 // pred_region
          %s1751 = ssub.s32 128, 128
          %1752 = vsyncadd %s1743, %s1751
          %s1753 = sadd.s32 %s35, %s34
          %s1754 = smul.addr %s1753, 128
          %s1755 = scalar_lea.hbm %s14, %s1754
          %s1757 = sshll.u32 %s1746, 4
          %s1758 = int_to_ptr.vmem [resolvable:$true] %s1757
          %1760 = dma.vmem_to_hbm [thread:$0]  %s1758, 128, %s1755, %s1743
        $region92: #{tpu_custom_call.1} parent=75 // pred_fallthru
          _
      $region76: #{tpu_custom_call.1} parent=5 // pred_fallthru
        _
      %p1761 = scmp.le.s32.totalorder 2, %s24
      // Predicated region
      $region93: #{tpu_custom_call.1} parent=5 // pred_check
        %p1762 = pneg %p1761
      $region94: #{tpu_custom_call.1} parent=5 // pred_check_branch
        %1764 = sbr.rel (%p1762) target = $region96
      $region95: #{tpu_custom_call.1} parent=5 // pred_region
        %s1765 = ssub.s32 %s24, 2
        // Predicated region
        $region97: #{tpu_custom_call.1} parent=95 // pred_check
          %p1766 = pneg %p397
        $region98: #{tpu_custom_call.1} parent=95 // pred_check_branch
          %1768 = sbr.rel (%p1766) target = $region100
        $region99: #{tpu_custom_call.1} parent=95 // pred_region
          %s1769 = sand.u32 %s382, 1
          %s1770 = scalar_lea.sflag [#allocation5], %s1769
          %s1771 = sand.u32 %s382, 1
          %s1772 = smul.addr %s1771, 8
          %s1773 = scalar_lea.vmem [#allocation7], %s1772
          %1774 = dma.done %s1770, 128
        $region100: #{tpu_custom_call.1} parent=95 // pred_fallthru
          _
      $region96: #{tpu_custom_call.1} parent=5 // pred_fallthru
        _
    $region6: #{tpu_custom_call.1} parent=1 // loop_footer
      %s28 = sadd.s32 1, %s24
    $region7: #{tpu_custom_call.1} parent=1 // loop_footer_branch
      %23 = sbr.rel target = $region3
    $region8: #{tpu_custom_call.1} parent=1 // loop_exit
      _
    %1775 = vsyncpa [#allocation5], 1
    %s1776 = scalar_lea.sflag [#allocation5], 1
    %1777 = vsyncpa %s1776, 1
    %1778 = vsyncpa [#allocation6], 1
    %s1779 = scalar_lea.sflag [#allocation6], 1
    %1780 = vsyncpa %s1779, 1

</llo_original>
